<compile_context>
chip_gen: v7x
topology: tpu7x:2x2x1
jax: 0.10.0
libtpu: 0.0.40
codegen_flags: <defaults>
</compile_context>

<pallas_src>
import functools

import jax
import jax.numpy as jnp
from jax.experimental import pallas as pl
from jax.experimental.pallas import tpu as pltpu


def _attention_kernel(x_ref, wqkv_ref, bqkv_ref, wproj_ref, bproj_ref, o_ref,
                      q_scr, k_scr, v_scr, ctx_scr,
                      *, n_heads, head_dim, n_tokens, block_samples, scale):
    """Processes `block_samples` samples per grid step.

    x_ref     : (Bt*N, D)        VMEM (tokens of Bt samples, flattened)
    wqkv_ref  : (D, 3D)          VMEM (pre-transposed: x @ W directly)
    bqkv_ref  : (1, 3D)          VMEM
    wproj_ref : (D, D)           VMEM (pre-transposed)
    bproj_ref : (1, D)           VMEM
    o_ref     : (Bt*N, D)        VMEM
    q/k/v_scr : (Bt*H, N, hd)    VMEM scratch (head-batched layout)
    ctx_scr   : (Bt*N, D)        VMEM scratch (lane-major context)
    """
    D = n_heads * head_dim
    N = n_tokens
    Bt = block_samples

    x = x_ref[...]                                             # (M, D), input dtype

    # Fused QKV projection: one matmul with K = D and a lane-dense 3D output.
    qkv = jnp.dot(x, wqkv_ref[...], preferred_element_type=jnp.float32)
    qkv = (qkv + bqkv_ref[...]).astype(x.dtype)                # (M, 3D)

    # Scatter per-(sample, head) q/k/v tiles into a leading batch dim so the
    # attention matmuls run as ONE batched contraction (static slice offsets).
    for b in range(Bt):
        r0 = b * N
        for h in range(n_heads):
            c0 = h * head_dim
            idx = b * n_heads + h
            q_scr[idx] = qkv[r0:r0 + N, c0:c0 + head_dim]
            k_scr[idx] = qkv[r0:r0 + N, D + c0:D + c0 + head_dim]
            v_scr[idx] = qkv[r0:r0 + N, 2 * D + c0:2 * D + c0 + head_dim]

    q = q_scr[...]                                             # (Bt*H, N, hd)
    k = k_scr[...]
    v = v_scr[...]

    # Batched scores + softmax (f32), attn dropout p=0.0 -> identity.
    s = jnp.einsum('bqd,bkd->bqk', q, k,
                   preferred_element_type=jnp.float32) * scale  # (Bt*H, N, N)
    s = s - jnp.max(s, axis=-1, keepdims=True)
    p = jnp.exp(s)
    denom = jnp.sum(p, axis=-1, keepdims=True)
    p = p * pl.reciprocal(denom, approx=True)                   # EUP reciprocal

    ctx = jnp.einsum('bqk,bkd->bqd', p.astype(v.dtype), v,
                     preferred_element_type=jnp.float32)        # (Bt*H, N, hd)

    # Scatter heads back to token-major, feature-minor layout (static lane
    # offsets into VMEM scratch — no jnp.concatenate / relayout).
    for b in range(Bt):
        r0 = b * N
        for h in range(n_heads):
            ctx_scr[r0:r0 + N, h * head_dim:(h + 1) * head_dim] = (
                ctx[b * n_heads + h].astype(ctx_scr.dtype))

    # Output projection (one fat matmul), proj dropout p=0.0 -> identity.
    out = jnp.dot(ctx_scr[...], wproj_ref[...],
                  preferred_element_type=jnp.float32)
    out = out + bproj_ref[...]
    o_ref[...] = out.astype(o_ref.dtype)


def _pick_block_samples(B, N):
    """Largest divisor of B such that Bt*N targets ~128 rows (MXU M-dim)."""
    target = max(1, -(-128 // N))        # ceil(128 / N)
    bt = 1
    for cand in range(1, B + 1):
        if B % cand == 0 and cand <= target:
            bt = cand
    return bt


def attention_forward(x, wqkv, bqkv, wproj, bproj, *, n_heads, block_samples=None):
    """x: (B, N, dim) -> (B, N, dim). Weights in PyTorch nn.Linear layout (out, in)."""
    B, N, dim = x.shape
    assert dim % n_heads == 0
    head_dim = dim // n_heads
    scale = head_dim ** (-0.5)

    bt = _pick_block_samples(B, N) if block_samples is None else block_samples
    assert B % bt == 0
    M = bt * N

    # One-time layout prep in the wrapper (folded into parameter layout by XLA).
    wqkv_t = wqkv.T                        # (dim, 3*dim)
    wproj_t = wproj.T                      # (dim, dim)
    bqkv2 = bqkv.reshape(1, 3 * dim)
    bproj2 = bproj.reshape(1, dim)
    x_flat = x.reshape(B * N, dim)

    kernel = functools.partial(_attention_kernel,
                               n_heads=n_heads, head_dim=head_dim,
                               n_tokens=N, block_samples=bt, scale=scale)

    out_flat = pl.pallas_call(
        kernel,
        out_shape=jax.ShapeDtypeStruct((B * N, dim), x.dtype),
        grid_spec=pltpu.PrefetchScalarGridSpec(
            num_scalar_prefetch=0,
            grid=(B // bt,),
            in_specs=[
                pl.BlockSpec((M, dim), lambda i: (i, 0)),          # x (Bt samples)
                pl.BlockSpec((dim, 3 * dim), lambda i: (0, 0)),    # WqkvT (full)
                pl.BlockSpec((1, 3 * dim), lambda i: (0, 0)),      # bqkv
                pl.BlockSpec((dim, dim), lambda i: (0, 0)),        # WprojT (full)
                pl.BlockSpec((1, dim), lambda i: (0, 0)),          # bproj
            ],
            out_specs=pl.BlockSpec((M, dim), lambda i: (i, 0)),
            scratch_shapes=[
                pltpu.VMEM((bt * n_heads, N, head_dim), x.dtype),  # q
                pltpu.VMEM((bt * n_heads, N, head_dim), x.dtype),  # k
                pltpu.VMEM((bt * n_heads, N, head_dim), x.dtype),  # v
                pltpu.VMEM((M, dim), x.dtype),                     # ctx
            ],
        ),
        compiler_params=pltpu.CompilerParams(
            dimension_semantics=("parallel",),
            vmem_limit_bytes=32 * 1024 * 1024,
        ),
    )(x_flat, wqkv_t, bqkv2, wproj_t, bproj2)

    return out_flat.reshape(B, N, dim)


def attention_reference(x, wqkv, bqkv, wproj, bproj, *, n_heads):
    """Pure-JAX reference mirroring the PyTorch module."""
    B, N, dim = x.shape
    head_dim = dim // n_heads
    scale = head_dim ** (-0.5)
    qkv = jnp.einsum('bnd,ed->bne', x, wqkv) + bqkv                      # (B, N, 3D)
    qkv = qkv.reshape(B, N, 3, n_heads, head_dim).transpose(2, 0, 3, 1, 4)
    q, k, v = qkv[0], qkv[1], qkv[2]                                     # (B, H, N, hd)
    score = jnp.einsum('bhqd,bhkd->bhqk', q, k) * scale
    attn = jax.nn.softmax(score, axis=-1)
    ctx = jnp.einsum('bhqk,bhkd->bhqd', attn, v)                         # (B, H, N, hd)
    ctx = ctx.transpose(0, 2, 1, 3).reshape(B, N, dim)
    return jnp.einsum('bnd,ed->bne', ctx, wproj) + bproj


if __name__ == "__main__":
    # Small shapes consistent with the module: batch=2, tokens=8, dim=32, heads=4.
    B, N, dim, n_heads = 2, 8, 32, 4

    key = jax.random.PRNGKey(0)
    kx, kw1, kb1, kw2, kb2 = jax.random.split(key, 5)

    x = jax.random.normal(kx, (B, N, dim), dtype=jnp.float32)
    wqkv = jax.random.normal(kw1, (3 * dim, dim), dtype=jnp.float32) * 0.05
    bqkv = jax.random.normal(kb1, (3 * dim,), dtype=jnp.float32) * 0.05
    wproj = jax.random.normal(kw2, (dim, dim), dtype=jnp.float32) * 0.05
    bproj = jax.random.normal(kb2, (dim,), dtype=jnp.float32) * 0.05

    out = attention_forward(x, wqkv, bqkv, wproj, bproj, n_heads=n_heads)
    out = jax.block_until_ready(out)

    ref = attention_reference(x, wqkv, bqkv, wproj, bproj, n_heads=n_heads)
    assert out.shape == (B, N, dim)
    # Slightly relaxed tolerance: softmax denom uses the EUP approximate reciprocal.
    assert jnp.allclose(out, ref, atol=2e-3, rtol=2e-3), "mismatch vs reference"

    print("KERNEL_OK")
</pallas_src>

<mosaic_0001>
module attributes {stable_mosaic.version = 11 : i64} {
  func.func @_attention_kernel(%arg0: i32, %arg1: memref<16x32xf32, #tpu.memory_space<vmem>>, %arg2: memref<32x96xf32, #tpu.memory_space<vmem>>, %arg3: memref<1x96xf32, #tpu.memory_space<vmem>>, %arg4: memref<32x32xf32, #tpu.memory_space<vmem>>, %arg5: memref<1x32xf32, #tpu.memory_space<vmem>>, %arg6: memref<16x32xf32, #tpu.memory_space<vmem>>, %arg7: memref<8x8x8xf32, #tpu.memory_space<vmem>>, %arg8: memref<8x8x8xf32, #tpu.memory_space<vmem>>, %arg9: memref<8x8x8xf32, #tpu.memory_space<vmem>>, %arg10: memref<16x32xf32, #tpu.memory_space<vmem>>) attributes {dimension_semantics = [#tpu.dimension_semantics<parallel>], iteration_bounds = array<i64: 1>, scalar_prefetch = 0 : i64, scratch_operands = 4 : i64, tpu.core_type = #tpu.core_type<tc>, window_params = [{transform_indices = @transform_0, window_bounds = array<i64: 16, 32>}, {pipeline_mode = #tpu.pipeline_mode<synchronous>, transform_indices = @transform_1, window_bounds = array<i64: 32, 96>}, {pipeline_mode = #tpu.pipeline_mode<synchronous>, transform_indices = @transform_2, window_bounds = array<i64: 1, 96>}, {pipeline_mode = #tpu.pipeline_mode<synchronous>, transform_indices = @transform_3, window_bounds = array<i64: 32, 32>}, {pipeline_mode = #tpu.pipeline_mode<synchronous>, transform_indices = @transform_4, window_bounds = array<i64: 1, 32>}, {transform_indices = @transform_5, window_bounds = array<i64: 16, 32>}]} {
    %c0 = arith.constant 0 : index
    %c0_0 = arith.constant 0 : index
    %0 = vector.load %arg1[%c0, %c0_0] : memref<16x32xf32, #tpu.memory_space<vmem>>, vector<16x32xf32>
    %c0_1 = arith.constant 0 : index
    %c0_2 = arith.constant 0 : index
    %1 = vector.load %arg2[%c0_1, %c0_2] : memref<32x96xf32, #tpu.memory_space<vmem>>, vector<32x96xf32>
    %cst = arith.constant dense<0.000000e+00> : vector<16x96xf32>
    %2 = tpu.matmul %0, %1, %cst {dimension_numbers = #tpu.dot_dimension_numbers<[1], [0], [0], [1], [0, 0, 1, 1], [], []>} : vector<16x32xf32>, vector<32x96xf32>, vector<16x96xf32> -> vector<16x96xf32>
    %c0_3 = arith.constant 0 : index
    %c0_4 = arith.constant 0 : index
    %3 = vector.load %arg3[%c0_3, %c0_4] : memref<1x96xf32, #tpu.memory_space<vmem>>, vector<1x96xf32>
    %4 = vector.broadcast %3 : vector<1x96xf32> to vector<16x96xf32>
    %5 = arith.addf %2, %4 : vector<16x96xf32>
    %6 = vector.extract_strided_slice %5 {offsets = [0, 0], sizes = [8, 8], strides = [1, 1]} : vector<16x96xf32> to vector<8x8xf32>
    %c0_5 = arith.constant 0 : index
    %c0_6 = arith.constant 0 : index
    %c0_7 = arith.constant 0 : index
    %7 = vector.load %arg7[%c0_5, %c0_6, %c0_7] : memref<8x8x8xf32, #tpu.memory_space<vmem>>, vector<1x8x8xf32>
    %8 = vector.shape_cast %7 : vector<1x8x8xf32> to vector<8x8xf32>
    %9 = vector.shape_cast %6 : vector<8x8xf32> to vector<1x8x8xf32>
    tpu.vector_store %arg7[%c0_5, %c0_6, %c0_7], %9 {strides = array<i32>} : memref<8x8x8xf32, #tpu.memory_space<vmem>>, vector<1x8x8xf32>,
    %10 = vector.extract_strided_slice %5 {offsets = [0, 32], sizes = [8, 8], strides = [1, 1]} : vector<16x96xf32> to vector<8x8xf32>
    %c0_8 = arith.constant 0 : index
    %c0_9 = arith.constant 0 : index
    %c0_10 = arith.constant 0 : index
    %11 = vector.load %arg8[%c0_8, %c0_9, %c0_10] : memref<8x8x8xf32, #tpu.memory_space<vmem>>, vector<1x8x8xf32>
    %12 = vector.shape_cast %11 : vector<1x8x8xf32> to vector<8x8xf32>
    %13 = vector.shape_cast %10 : vector<8x8xf32> to vector<1x8x8xf32>
    tpu.vector_store %arg8[%c0_8, %c0_9, %c0_10], %13 {strides = array<i32>} : memref<8x8x8xf32, #tpu.memory_space<vmem>>, vector<1x8x8xf32>,
    %14 = vector.extract_strided_slice %5 {offsets = [0, 64], sizes = [8, 8], strides = [1, 1]} : vector<16x96xf32> to vector<8x8xf32>
    %c0_11 = arith.constant 0 : index
    %c0_12 = arith.constant 0 : index
    %c0_13 = arith.constant 0 : index
    %15 = vector.load %arg9[%c0_11, %c0_12, %c0_13] : memref<8x8x8xf32, #tpu.memory_space<vmem>>, vector<1x8x8xf32>
    %16 = vector.shape_cast %15 : vector<1x8x8xf32> to vector<8x8xf32>
    %17 = vector.shape_cast %14 : vector<8x8xf32> to vector<1x8x8xf32>
    tpu.vector_store %arg9[%c0_11, %c0_12, %c0_13], %17 {strides = array<i32>} : memref<8x8x8xf32, #tpu.memory_space<vmem>>, vector<1x8x8xf32>,
    %18 = vector.extract_strided_slice %5 {offsets = [0, 8], sizes = [8, 8], strides = [1, 1]} : vector<16x96xf32> to vector<8x8xf32>
    %c1 = arith.constant 1 : index
    %c0_14 = arith.constant 0 : index
    %c0_15 = arith.constant 0 : index
    %19 = vector.load %arg7[%c1, %c0_14, %c0_15] : memref<8x8x8xf32, #tpu.memory_space<vmem>>, vector<1x8x8xf32>
    %20 = vector.shape_cast %19 : vector<1x8x8xf32> to vector<8x8xf32>
    %21 = vector.shape_cast %18 : vector<8x8xf32> to vector<1x8x8xf32>
    tpu.vector_store %arg7[%c1, %c0_14, %c0_15], %21 {strides = array<i32>} : memref<8x8x8xf32, #tpu.memory_space<vmem>>, vector<1x8x8xf32>,
    %22 = vector.extract_strided_slice %5 {offsets = [0, 40], sizes = [8, 8], strides = [1, 1]} : vector<16x96xf32> to vector<8x8xf32>
    %c1_16 = arith.constant 1 : index
    %c0_17 = arith.constant 0 : index
    %c0_18 = arith.constant 0 : index
    %23 = vector.load %arg8[%c1_16, %c0_17, %c0_18] : memref<8x8x8xf32, #tpu.memory_space<vmem>>, vector<1x8x8xf32>
    %24 = vector.shape_cast %23 : vector<1x8x8xf32> to vector<8x8xf32>
    %25 = vector.shape_cast %22 : vector<8x8xf32> to vector<1x8x8xf32>
    tpu.vector_store %arg8[%c1_16, %c0_17, %c0_18], %25 {strides = array<i32>} : memref<8x8x8xf32, #tpu.memory_space<vmem>>, vector<1x8x8xf32>,
    %26 = vector.extract_strided_slice %5 {offsets = [0, 72], sizes = [8, 8], strides = [1, 1]} : vector<16x96xf32> to vector<8x8xf32>
    %c1_19 = arith.constant 1 : index
    %c0_20 = arith.constant 0 : index
    %c0_21 = arith.constant 0 : index
    %27 = vector.load %arg9[%c1_19, %c0_20, %c0_21] : memref<8x8x8xf32, #tpu.memory_space<vmem>>, vector<1x8x8xf32>
    %28 = vector.shape_cast %27 : vector<1x8x8xf32> to vector<8x8xf32>
    %29 = vector.shape_cast %26 : vector<8x8xf32> to vector<1x8x8xf32>
    tpu.vector_store %arg9[%c1_19, %c0_20, %c0_21], %29 {strides = array<i32>} : memref<8x8x8xf32, #tpu.memory_space<vmem>>, vector<1x8x8xf32>,
    %30 = vector.extract_strided_slice %5 {offsets = [0, 16], sizes = [8, 8], strides = [1, 1]} : vector<16x96xf32> to vector<8x8xf32>
    %c2 = arith.constant 2 : index
    %c0_22 = arith.constant 0 : index
    %c0_23 = arith.constant 0 : index
    %31 = vector.load %arg7[%c2, %c0_22, %c0_23] : memref<8x8x8xf32, #tpu.memory_space<vmem>>, vector<1x8x8xf32>
    %32 = vector.shape_cast %31 : vector<1x8x8xf32> to vector<8x8xf32>
    %33 = vector.shape_cast %30 : vector<8x8xf32> to vector<1x8x8xf32>
    tpu.vector_store %arg7[%c2, %c0_22, %c0_23], %33 {strides = array<i32>} : memref<8x8x8xf32, #tpu.memory_space<vmem>>, vector<1x8x8xf32>,
    %34 = vector.extract_strided_slice %5 {offsets = [0, 48], sizes = [8, 8], strides = [1, 1]} : vector<16x96xf32> to vector<8x8xf32>
    %c2_24 = arith.constant 2 : index
    %c0_25 = arith.constant 0 : index
    %c0_26 = arith.constant 0 : index
    %35 = vector.load %arg8[%c2_24, %c0_25, %c0_26] : memref<8x8x8xf32, #tpu.memory_space<vmem>>, vector<1x8x8xf32>
    %36 = vector.shape_cast %35 : vector<1x8x8xf32> to vector<8x8xf32>
    %37 = vector.shape_cast %34 : vector<8x8xf32> to vector<1x8x8xf32>
    tpu.vector_store %arg8[%c2_24, %c0_25, %c0_26], %37 {strides = array<i32>} : memref<8x8x8xf32, #tpu.memory_space<vmem>>, vector<1x8x8xf32>,
    %38 = vector.extract_strided_slice %5 {offsets = [0, 80], sizes = [8, 8], strides = [1, 1]} : vector<16x96xf32> to vector<8x8xf32>
    %c2_27 = arith.constant 2 : index
    %c0_28 = arith.constant 0 : index
    %c0_29 = arith.constant 0 : index
    %39 = vector.load %arg9[%c2_27, %c0_28, %c0_29] : memref<8x8x8xf32, #tpu.memory_space<vmem>>, vector<1x8x8xf32>
    %40 = vector.shape_cast %39 : vector<1x8x8xf32> to vector<8x8xf32>
    %41 = vector.shape_cast %38 : vector<8x8xf32> to vector<1x8x8xf32>
    tpu.vector_store %arg9[%c2_27, %c0_28, %c0_29], %41 {strides = array<i32>} : memref<8x8x8xf32, #tpu.memory_space<vmem>>, vector<1x8x8xf32>,
    %42 = vector.extract_strided_slice %5 {offsets = [0, 24], sizes = [8, 8], strides = [1, 1]} : vector<16x96xf32> to vector<8x8xf32>
    %c3 = arith.constant 3 : index
    %c0_30 = arith.constant 0 : index
    %c0_31 = arith.constant 0 : index
    %43 = vector.load %arg7[%c3, %c0_30, %c0_31] : memref<8x8x8xf32, #tpu.memory_space<vmem>>, vector<1x8x8xf32>
    %44 = vector.shape_cast %43 : vector<1x8x8xf32> to vector<8x8xf32>
    %45 = vector.shape_cast %42 : vector<8x8xf32> to vector<1x8x8xf32>
    tpu.vector_store %arg7[%c3, %c0_30, %c0_31], %45 {strides = array<i32>} : memref<8x8x8xf32, #tpu.memory_space<vmem>>, vector<1x8x8xf32>,
    %46 = vector.extract_strided_slice %5 {offsets = [0, 56], sizes = [8, 8], strides = [1, 1]} : vector<16x96xf32> to vector<8x8xf32>
    %c3_32 = arith.constant 3 : index
    %c0_33 = arith.constant 0 : index
    %c0_34 = arith.constant 0 : index
    %47 = vector.load %arg8[%c3_32, %c0_33, %c0_34] : memref<8x8x8xf32, #tpu.memory_space<vmem>>, vector<1x8x8xf32>
    %48 = vector.shape_cast %47 : vector<1x8x8xf32> to vector<8x8xf32>
    %49 = vector.shape_cast %46 : vector<8x8xf32> to vector<1x8x8xf32>
    tpu.vector_store %arg8[%c3_32, %c0_33, %c0_34], %49 {strides = array<i32>} : memref<8x8x8xf32, #tpu.memory_space<vmem>>, vector<1x8x8xf32>,
    %50 = vector.extract_strided_slice %5 {offsets = [0, 88], sizes = [8, 8], strides = [1, 1]} : vector<16x96xf32> to vector<8x8xf32>
    %c3_35 = arith.constant 3 : index
    %c0_36 = arith.constant 0 : index
    %c0_37 = arith.constant 0 : index
    %51 = vector.load %arg9[%c3_35, %c0_36, %c0_37] : memref<8x8x8xf32, #tpu.memory_space<vmem>>, vector<1x8x8xf32>
    %52 = vector.shape_cast %51 : vector<1x8x8xf32> to vector<8x8xf32>
    %53 = vector.shape_cast %50 : vector<8x8xf32> to vector<1x8x8xf32>
    tpu.vector_store %arg9[%c3_35, %c0_36, %c0_37], %53 {strides = array<i32>} : memref<8x8x8xf32, #tpu.memory_space<vmem>>, vector<1x8x8xf32>,
    %54 = vector.extract_strided_slice %5 {offsets = [8, 0], sizes = [8, 8], strides = [1, 1]} : vector<16x96xf32> to vector<8x8xf32>
    %c4 = arith.constant 4 : index
    %c0_38 = arith.constant 0 : index
    %c0_39 = arith.constant 0 : index
    %55 = vector.load %arg7[%c4, %c0_38, %c0_39] : memref<8x8x8xf32, #tpu.memory_space<vmem>>, vector<1x8x8xf32>
    %56 = vector.shape_cast %55 : vector<1x8x8xf32> to vector<8x8xf32>
    %57 = vector.shape_cast %54 : vector<8x8xf32> to vector<1x8x8xf32>
    tpu.vector_store %arg7[%c4, %c0_38, %c0_39], %57 {strides = array<i32>} : memref<8x8x8xf32, #tpu.memory_space<vmem>>, vector<1x8x8xf32>,
    %58 = vector.extract_strided_slice %5 {offsets = [8, 32], sizes = [8, 8], strides = [1, 1]} : vector<16x96xf32> to vector<8x8xf32>
    %c4_40 = arith.constant 4 : index
    %c0_41 = arith.constant 0 : index
    %c0_42 = arith.constant 0 : index
    %59 = vector.load %arg8[%c4_40, %c0_41, %c0_42] : memref<8x8x8xf32, #tpu.memory_space<vmem>>, vector<1x8x8xf32>
    %60 = vector.shape_cast %59 : vector<1x8x8xf32> to vector<8x8xf32>
    %61 = vector.shape_cast %58 : vector<8x8xf32> to vector<1x8x8xf32>
    tpu.vector_store %arg8[%c4_40, %c0_41, %c0_42], %61 {strides = array<i32>} : memref<8x8x8xf32, #tpu.memory_space<vmem>>, vector<1x8x8xf32>,
    %62 = vector.extract_strided_slice %5 {offsets = [8, 64], sizes = [8, 8], strides = [1, 1]} : vector<16x96xf32> to vector<8x8xf32>
    %c4_43 = arith.constant 4 : index
    %c0_44 = arith.constant 0 : index
    %c0_45 = arith.constant 0 : index
    %63 = vector.load %arg9[%c4_43, %c0_44, %c0_45] : memref<8x8x8xf32, #tpu.memory_space<vmem>>, vector<1x8x8xf32>
    %64 = vector.shape_cast %63 : vector<1x8x8xf32> to vector<8x8xf32>
    %65 = vector.shape_cast %62 : vector<8x8xf32> to vector<1x8x8xf32>
    tpu.vector_store %arg9[%c4_43, %c0_44, %c0_45], %65 {strides = array<i32>} : memref<8x8x8xf32, #tpu.memory_space<vmem>>, vector<1x8x8xf32>,
    %66 = vector.extract_strided_slice %5 {offsets = [8, 8], sizes = [8, 8], strides = [1, 1]} : vector<16x96xf32> to vector<8x8xf32>
    %c5 = arith.constant 5 : index
    %c0_46 = arith.constant 0 : index
    %c0_47 = arith.constant 0 : index
    %67 = vector.load %arg7[%c5, %c0_46, %c0_47] : memref<8x8x8xf32, #tpu.memory_space<vmem>>, vector<1x8x8xf32>
    %68 = vector.shape_cast %67 : vector<1x8x8xf32> to vector<8x8xf32>
    %69 = vector.shape_cast %66 : vector<8x8xf32> to vector<1x8x8xf32>
    tpu.vector_store %arg7[%c5, %c0_46, %c0_47], %69 {strides = array<i32>} : memref<8x8x8xf32, #tpu.memory_space<vmem>>, vector<1x8x8xf32>,
    %70 = vector.extract_strided_slice %5 {offsets = [8, 40], sizes = [8, 8], strides = [1, 1]} : vector<16x96xf32> to vector<8x8xf32>
    %c5_48 = arith.constant 5 : index
    %c0_49 = arith.constant 0 : index
    %c0_50 = arith.constant 0 : index
    %71 = vector.load %arg8[%c5_48, %c0_49, %c0_50] : memref<8x8x8xf32, #tpu.memory_space<vmem>>, vector<1x8x8xf32>
    %72 = vector.shape_cast %71 : vector<1x8x8xf32> to vector<8x8xf32>
    %73 = vector.shape_cast %70 : vector<8x8xf32> to vector<1x8x8xf32>
    tpu.vector_store %arg8[%c5_48, %c0_49, %c0_50], %73 {strides = array<i32>} : memref<8x8x8xf32, #tpu.memory_space<vmem>>, vector<1x8x8xf32>,
    %74 = vector.extract_strided_slice %5 {offsets = [8, 72], sizes = [8, 8], strides = [1, 1]} : vector<16x96xf32> to vector<8x8xf32>
    %c5_51 = arith.constant 5 : index
    %c0_52 = arith.constant 0 : index
    %c0_53 = arith.constant 0 : index
    %75 = vector.load %arg9[%c5_51, %c0_52, %c0_53] : memref<8x8x8xf32, #tpu.memory_space<vmem>>, vector<1x8x8xf32>
    %76 = vector.shape_cast %75 : vector<1x8x8xf32> to vector<8x8xf32>
    %77 = vector.shape_cast %74 : vector<8x8xf32> to vector<1x8x8xf32>
    tpu.vector_store %arg9[%c5_51, %c0_52, %c0_53], %77 {strides = array<i32>} : memref<8x8x8xf32, #tpu.memory_space<vmem>>, vector<1x8x8xf32>,
    %78 = vector.extract_strided_slice %5 {offsets = [8, 16], sizes = [8, 8], strides = [1, 1]} : vector<16x96xf32> to vector<8x8xf32>
    %c6 = arith.constant 6 : index
    %c0_54 = arith.constant 0 : index
    %c0_55 = arith.constant 0 : index
    %79 = vector.load %arg7[%c6, %c0_54, %c0_55] : memref<8x8x8xf32, #tpu.memory_space<vmem>>, vector<1x8x8xf32>
    %80 = vector.shape_cast %79 : vector<1x8x8xf32> to vector<8x8xf32>
    %81 = vector.shape_cast %78 : vector<8x8xf32> to vector<1x8x8xf32>
    tpu.vector_store %arg7[%c6, %c0_54, %c0_55], %81 {strides = array<i32>} : memref<8x8x8xf32, #tpu.memory_space<vmem>>, vector<1x8x8xf32>,
    %82 = vector.extract_strided_slice %5 {offsets = [8, 48], sizes = [8, 8], strides = [1, 1]} : vector<16x96xf32> to vector<8x8xf32>
    %c6_56 = arith.constant 6 : index
    %c0_57 = arith.constant 0 : index
    %c0_58 = arith.constant 0 : index
    %83 = vector.load %arg8[%c6_56, %c0_57, %c0_58] : memref<8x8x8xf32, #tpu.memory_space<vmem>>, vector<1x8x8xf32>
    %84 = vector.shape_cast %83 : vector<1x8x8xf32> to vector<8x8xf32>
    %85 = vector.shape_cast %82 : vector<8x8xf32> to vector<1x8x8xf32>
    tpu.vector_store %arg8[%c6_56, %c0_57, %c0_58], %85 {strides = array<i32>} : memref<8x8x8xf32, #tpu.memory_space<vmem>>, vector<1x8x8xf32>,
    %86 = vector.extract_strided_slice %5 {offsets = [8, 80], sizes = [8, 8], strides = [1, 1]} : vector<16x96xf32> to vector<8x8xf32>
    %c6_59 = arith.constant 6 : index
    %c0_60 = arith.constant 0 : index
    %c0_61 = arith.constant 0 : index
    %87 = vector.load %arg9[%c6_59, %c0_60, %c0_61] : memref<8x8x8xf32, #tpu.memory_space<vmem>>, vector<1x8x8xf32>
    %88 = vector.shape_cast %87 : vector<1x8x8xf32> to vector<8x8xf32>
    %89 = vector.shape_cast %86 : vector<8x8xf32> to vector<1x8x8xf32>
    tpu.vector_store %arg9[%c6_59, %c0_60, %c0_61], %89 {strides = array<i32>} : memref<8x8x8xf32, #tpu.memory_space<vmem>>, vector<1x8x8xf32>,
    %90 = vector.extract_strided_slice %5 {offsets = [8, 24], sizes = [8, 8], strides = [1, 1]} : vector<16x96xf32> to vector<8x8xf32>
    %c7 = arith.constant 7 : index
    %c0_62 = arith.constant 0 : index
    %c0_63 = arith.constant 0 : index
    %91 = vector.load %arg7[%c7, %c0_62, %c0_63] : memref<8x8x8xf32, #tpu.memory_space<vmem>>, vector<1x8x8xf32>
    %92 = vector.shape_cast %91 : vector<1x8x8xf32> to vector<8x8xf32>
    %93 = vector.shape_cast %90 : vector<8x8xf32> to vector<1x8x8xf32>
    tpu.vector_store %arg7[%c7, %c0_62, %c0_63], %93 {strides = array<i32>} : memref<8x8x8xf32, #tpu.memory_space<vmem>>, vector<1x8x8xf32>,
    %94 = vector.extract_strided_slice %5 {offsets = [8, 56], sizes = [8, 8], strides = [1, 1]} : vector<16x96xf32> to vector<8x8xf32>
    %c7_64 = arith.constant 7 : index
    %c0_65 = arith.constant 0 : index
    %c0_66 = arith.constant 0 : index
    %95 = vector.load %arg8[%c7_64, %c0_65, %c0_66] : memref<8x8x8xf32, #tpu.memory_space<vmem>>, vector<1x8x8xf32>
    %96 = vector.shape_cast %95 : vector<1x8x8xf32> to vector<8x8xf32>
    %97 = vector.shape_cast %94 : vector<8x8xf32> to vector<1x8x8xf32>
    tpu.vector_store %arg8[%c7_64, %c0_65, %c0_66], %97 {strides = array<i32>} : memref<8x8x8xf32, #tpu.memory_space<vmem>>, vector<1x8x8xf32>,
    %98 = vector.extract_strided_slice %5 {offsets = [8, 88], sizes = [8, 8], strides = [1, 1]} : vector<16x96xf32> to vector<8x8xf32>
    %c7_67 = arith.constant 7 : index
    %c0_68 = arith.constant 0 : index
    %c0_69 = arith.constant 0 : index
    %99 = vector.load %arg9[%c7_67, %c0_68, %c0_69] : memref<8x8x8xf32, #tpu.memory_space<vmem>>, vector<1x8x8xf32>
    %100 = vector.shape_cast %99 : vector<1x8x8xf32> to vector<8x8xf32>
    %101 = vector.shape_cast %98 : vector<8x8xf32> to vector<1x8x8xf32>
    tpu.vector_store %arg9[%c7_67, %c0_68, %c0_69], %101 {strides = array<i32>} : memref<8x8x8xf32, #tpu.memory_space<vmem>>, vector<1x8x8xf32>,
    %c0_70 = arith.constant 0 : index
    %c0_71 = arith.constant 0 : index
    %c0_72 = arith.constant 0 : index
    %102 = vector.load %arg7[%c0_70, %c0_71, %c0_72] : memref<8x8x8xf32, #tpu.memory_space<vmem>>, vector<8x8x8xf32>
    %c0_73 = arith.constant 0 : index
    %c0_74 = arith.constant 0 : index
    %c0_75 = arith.constant 0 : index
    %103 = vector.load %arg8[%c0_73, %c0_74, %c0_75] : memref<8x8x8xf32, #tpu.memory_space<vmem>>, vector<8x8x8xf32>
    %c0_76 = arith.constant 0 : index
    %c0_77 = arith.constant 0 : index
    %c0_78 = arith.constant 0 : index
    %104 = vector.load %arg9[%c0_76, %c0_77, %c0_78] : memref<8x8x8xf32, #tpu.memory_space<vmem>>, vector<8x8x8xf32>
    "tpu.trace_start"() <{level = 10 : i32, message = "bqd,bkd->bqk"}> : () -> ()
    %cst_79 = arith.constant dense<0.000000e+00> : vector<8x8x8xf32>
    %105 = tpu.matmul %102, %103, %cst_79 {dimension_numbers = #tpu.dot_dimension_numbers<[2], [2], [1], [1], [0, 0, 0, 1, 1, 1], [0], [0]>} : vector<8x8x8xf32>, vector<8x8x8xf32>, vector<8x8x8xf32> -> vector<8x8x8xf32>
    "tpu.trace_stop"() : () -> ()
    %cst_80 = arith.constant 0.353553385 : f32
    %106 = vector.broadcast %cst_80 : f32 to vector<8x8x8xf32>
    %107 = arith.mulf %105, %106 : vector<8x8x8xf32>
    %cst_81 = arith.constant dense<0xFF800000> : vector<8x8xf32>
    %108 = vector.multi_reduction <maximumf>, %107, %cst_81 [2] : vector<8x8x8xf32> to vector<8x8xf32>
    %109 = vector.shape_cast %108 : vector<8x8xf32> to vector<8x8x1xf32>
    %110 = vector.broadcast %109 : vector<8x8x1xf32> to vector<8x8x8xf32>
    %111 = arith.subf %107, %110 : vector<8x8x8xf32>
    %112 = math.exp %111 : vector<8x8x8xf32>
    %cst_82 = arith.constant dense<0.000000e+00> : vector<8x8xf32>
    %113 = vector.multi_reduction <add>, %112, %cst_82 [2] : vector<8x8x8xf32> to vector<8x8xf32>
    %114 = vector.shape_cast %113 : vector<8x8xf32> to vector<8x8x1xf32>
    %115 = tpu.reciprocal %114 {approx = true} : vector<8x8x1xf32> -> vector<8x8x1xf32>
    %116 = vector.broadcast %115 : vector<8x8x1xf32> to vector<8x8x8xf32>
    %117 = arith.mulf %112, %116 : vector<8x8x8xf32>
    "tpu.trace_start"() <{level = 10 : i32, message = "bqk,bkd->bqd"}> : () -> ()
    %cst_83 = arith.constant dense<0.000000e+00> : vector<8x8x8xf32>
    %118 = tpu.matmul %117, %104, %cst_83 {dimension_numbers = #tpu.dot_dimension_numbers<[2], [1], [1], [2], [0, 0, 0, 1, 1, 2], [0], [0]>} : vector<8x8x8xf32>, vector<8x8x8xf32>, vector<8x8x8xf32> -> vector<8x8x8xf32>
    "tpu.trace_stop"() : () -> ()
    %119 = vector.extract_strided_slice %118 {offsets = [0, 0, 0], sizes = [1, 8, 8], strides = [1, 1, 1]} : vector<8x8x8xf32> to vector<1x8x8xf32>
    %120 = vector.shape_cast %119 : vector<1x8x8xf32> to vector<8x8xf32>
    %c0_84 = arith.constant 0 : index
    %c0_85 = arith.constant 0 : index
    %121 = vector.load %arg10[%c0_84, %c0_85] : memref<16x32xf32, #tpu.memory_space<vmem>>, vector<8x8xf32>
    tpu.vector_store %arg10[%c0_84, %c0_85], %120 {strides = array<i32>} : memref<16x32xf32, #tpu.memory_space<vmem>>, vector<8x8xf32>,
    %122 = vector.extract_strided_slice %118 {offsets = [1, 0, 0], sizes = [1, 8, 8], strides = [1, 1, 1]} : vector<8x8x8xf32> to vector<1x8x8xf32>
    %123 = vector.shape_cast %122 : vector<1x8x8xf32> to vector<8x8xf32>
    %c0_86 = arith.constant 0 : index
    %c8 = arith.constant 8 : index
    %124 = vector.load %arg10[%c0_86, %c8] : memref<16x32xf32, #tpu.memory_space<vmem>>, vector<8x8xf32>
    tpu.vector_store %arg10[%c0_86, %c8], %123 {strides = array<i32>} : memref<16x32xf32, #tpu.memory_space<vmem>>, vector<8x8xf32>,
    %125 = vector.extract_strided_slice %118 {offsets = [2, 0, 0], sizes = [1, 8, 8], strides = [1, 1, 1]} : vector<8x8x8xf32> to vector<1x8x8xf32>
    %126 = vector.shape_cast %125 : vector<1x8x8xf32> to vector<8x8xf32>
    %c0_87 = arith.constant 0 : index
    %c16 = arith.constant 16 : index
    %127 = vector.load %arg10[%c0_87, %c16] : memref<16x32xf32, #tpu.memory_space<vmem>>, vector<8x8xf32>
    tpu.vector_store %arg10[%c0_87, %c16], %126 {strides = array<i32>} : memref<16x32xf32, #tpu.memory_space<vmem>>, vector<8x8xf32>,
    %128 = vector.extract_strided_slice %118 {offsets = [3, 0, 0], sizes = [1, 8, 8], strides = [1, 1, 1]} : vector<8x8x8xf32> to vector<1x8x8xf32>
    %129 = vector.shape_cast %128 : vector<1x8x8xf32> to vector<8x8xf32>
    %c0_88 = arith.constant 0 : index
    %c24 = arith.constant 24 : index
    %130 = vector.load %arg10[%c0_88, %c24] : memref<16x32xf32, #tpu.memory_space<vmem>>, vector<8x8xf32>
    tpu.vector_store %arg10[%c0_88, %c24], %129 {strides = array<i32>} : memref<16x32xf32, #tpu.memory_space<vmem>>, vector<8x8xf32>,
    %131 = vector.extract_strided_slice %118 {offsets = [4, 0, 0], sizes = [1, 8, 8], strides = [1, 1, 1]} : vector<8x8x8xf32> to vector<1x8x8xf32>
    %132 = vector.shape_cast %131 : vector<1x8x8xf32> to vector<8x8xf32>
    %c8_89 = arith.constant 8 : index
    %c0_90 = arith.constant 0 : index
    %133 = vector.load %arg10[%c8_89, %c0_90] : memref<16x32xf32, #tpu.memory_space<vmem>>, vector<8x8xf32>
    tpu.vector_store %arg10[%c8_89, %c0_90], %132 {strides = array<i32>} : memref<16x32xf32, #tpu.memory_space<vmem>>, vector<8x8xf32>,
    %134 = vector.extract_strided_slice %118 {offsets = [5, 0, 0], sizes = [1, 8, 8], strides = [1, 1, 1]} : vector<8x8x8xf32> to vector<1x8x8xf32>
    %135 = vector.shape_cast %134 : vector<1x8x8xf32> to vector<8x8xf32>
    %c8_91 = arith.constant 8 : index
    %c8_92 = arith.constant 8 : index
    %136 = vector.load %arg10[%c8_91, %c8_92] : memref<16x32xf32, #tpu.memory_space<vmem>>, vector<8x8xf32>
    tpu.vector_store %arg10[%c8_91, %c8_92], %135 {strides = array<i32>} : memref<16x32xf32, #tpu.memory_space<vmem>>, vector<8x8xf32>,
    %137 = vector.extract_strided_slice %118 {offsets = [6, 0, 0], sizes = [1, 8, 8], strides = [1, 1, 1]} : vector<8x8x8xf32> to vector<1x8x8xf32>
    %138 = vector.shape_cast %137 : vector<1x8x8xf32> to vector<8x8xf32>
    %c8_93 = arith.constant 8 : index
    %c16_94 = arith.constant 16 : index
    %139 = vector.load %arg10[%c8_93, %c16_94] : memref<16x32xf32, #tpu.memory_space<vmem>>, vector<8x8xf32>
    tpu.vector_store %arg10[%c8_93, %c16_94], %138 {strides = array<i32>} : memref<16x32xf32, #tpu.memory_space<vmem>>, vector<8x8xf32>,
    %140 = vector.extract_strided_slice %118 {offsets = [7, 0, 0], sizes = [1, 8, 8], strides = [1, 1, 1]} : vector<8x8x8xf32> to vector<1x8x8xf32>
    %141 = vector.shape_cast %140 : vector<1x8x8xf32> to vector<8x8xf32>
    %c8_95 = arith.constant 8 : index
    %c24_96 = arith.constant 24 : index
    %142 = vector.load %arg10[%c8_95, %c24_96] : memref<16x32xf32, #tpu.memory_space<vmem>>, vector<8x8xf32>
    tpu.vector_store %arg10[%c8_95, %c24_96], %141 {strides = array<i32>} : memref<16x32xf32, #tpu.memory_space<vmem>>, vector<8x8xf32>,
    %c0_97 = arith.constant 0 : index
    %c0_98 = arith.constant 0 : index
    %143 = vector.load %arg10[%c0_97, %c0_98] : memref<16x32xf32, #tpu.memory_space<vmem>>, vector<16x32xf32>
    %c0_99 = arith.constant 0 : index
    %c0_100 = arith.constant 0 : index
    %144 = vector.load %arg4[%c0_99, %c0_100] : memref<32x32xf32, #tpu.memory_space<vmem>>, vector<32x32xf32>
    %cst_101 = arith.constant dense<0.000000e+00> : vector<16x32xf32>
    %145 = tpu.matmul %143, %144, %cst_101 {dimension_numbers = #tpu.dot_dimension_numbers<[1], [0], [0], [1], [0, 0, 1, 1], [], []>} : vector<16x32xf32>, vector<32x32xf32>, vector<16x32xf32> -> vector<16x32xf32>
    %c0_102 = arith.constant 0 : index
    %c0_103 = arith.constant 0 : index
    %146 = vector.load %arg5[%c0_102, %c0_103] : memref<1x32xf32, #tpu.memory_space<vmem>>, vector<1x32xf32>
    %147 = vector.broadcast %146 : vector<1x32xf32> to vector<16x32xf32>
    %148 = arith.addf %145, %147 : vector<16x32xf32>
    %c0_104 = arith.constant 0 : index
    %c0_105 = arith.constant 0 : index
    %149 = vector.load %arg6[%c0_104, %c0_105] : memref<16x32xf32, #tpu.memory_space<vmem>>, vector<16x32xf32>
    tpu.vector_store %arg6[%c0_104, %c0_105], %148 {strides = array<i32>} : memref<16x32xf32, #tpu.memory_space<vmem>>, vector<16x32xf32>,
    return
  }
  func.func @transform_0(%arg0: i32) -> (i32, i32) {
    %c0_i32 = arith.constant 0 : i32
    %c0_i32_0 = arith.constant 0 : i32
    return %arg0, %c0_i32 : i32, i32
  }
  func.func @transform_1(%arg0: i32) -> (i32, i32) {
    %c0_i32 = arith.constant 0 : i32
    %c0_i32_0 = arith.constant 0 : i32
    %c0_i32_1 = arith.constant 0 : i32
    return %c0_i32, %c0_i32_0 : i32, i32
  }
  func.func @transform_2(%arg0: i32) -> (i32, i32) {
    %c0_i32 = arith.constant 0 : i32
    %c0_i32_0 = arith.constant 0 : i32
    %c0_i32_1 = arith.constant 0 : i32
    return %c0_i32, %c0_i32_0 : i32, i32
  }
  func.func @transform_3(%arg0: i32) -> (i32, i32) {
    %c0_i32 = arith.constant 0 : i32
    %c0_i32_0 = arith.constant 0 : i32
    %c0_i32_1 = arith.constant 0 : i32
    return %c0_i32, %c0_i32_0 : i32, i32
  }
  func.func @transform_4(%arg0: i32) -> (i32, i32) {
    %c0_i32 = arith.constant 0 : i32
    %c0_i32_0 = arith.constant 0 : i32
    %c0_i32_1 = arith.constant 0 : i32
    return %c0_i32, %c0_i32_0 : i32, i32
  }
  func.func @transform_5(%arg0: i32) -> (i32, i32) {
    %c0_i32 = arith.constant 0 : i32
    %c0_i32_0 = arith.constant 0 : i32
    return %arg0, %c0_i32 : i32, i32
  }
}

</mosaic_0001>

<llo_original>
// kernel: tpu_custom_call.1
$region0: #{tpu_custom_call.1}
  #allocation0 [shape = 'u32[]', space=smem, size = 0x4, offset = 0x4, fixed_abs, tag = 'smem constant byte address 0x4 - core index']
  #allocation1 [shape = 'u32[144,128]{1,0:T(1,128)}', space=vmem, size = 0x12000, scoped, tag = 'internal scratch']
  #allocation2 [shape = 'f32[8,8,8]{2,1,0:T(8,128)}', space=vmem, size = 0x8000, scoped, tag = 'scratch operand']
  #allocation3 [shape = 'f32[8,8,8]{2,1,0:T(8,128)}', space=vmem, size = 0x8000, scoped, tag = 'scratch operand']
  #allocation4 [shape = 'f32[8,8,8]{2,1,0:T(8,128)}', space=vmem, size = 0x8000, scoped, tag = 'scratch operand']
  #allocation5 [shape = 'f32[16,32]{1,0:T(8,128)}', space=vmem, size = 0x2000, scoped, tag = 'scratch operand']
  %s0 = inlined_call_operand.hbm [shape: f32[16,32], index: 0, kind: input, shape index: {}]
  %s1 = inlined_call_operand.hbm [shape: f32[32,96], index: 1, kind: input, shape index: {}]
  %s2 = inlined_call_operand.vmem [shape: f32[1,96], index: 2, kind: input, shape index: {}]
  %s3 = inlined_call_operand.hbm [shape: f32[32,32], index: 3, kind: input, shape index: {}]
  %s4 = inlined_call_operand.vmem [shape: f32[1,32], index: 4, kind: input, shape index: {}]
  %s5 = inlined_call_operand.hbm [shape: f32[16,32], index: 5, kind: output, shape index: {}]
  %s6 = sld [smem:[#allocation0]]
  $region42: #{tpu_custom_call.1} parent=0
    _
  %s8 = ssub.s32 1, %s6
  %s9 = scalar_select 0, %s8, %s6
  $region1: #{tpu_custom_call.1} parent=0
    #allocation6 [shape = 'u8[8192]{0}', space=vmem, size = 0x2000, scoped, tag = 'input window, operand 0, single buffered']
    #allocation7 [shape = 's32[1]{0}', space=sflag, size = 0x4, scoped, tag = 'scoped memory for tpu_custom_call.1']
    #allocation8 [shape = 's32[1]{0}', space=sflag, size = 0x4, scoped, tag = 'scoped memory for tpu_custom_call.1']
    #allocation9 [shape = 'u8[16384]{0}', space=vmem, size = 0x4000, scoped, tag = 'input window, operand 1, single buffered']
    #allocation10 [shape = 's32[1]{0}', space=sflag, size = 0x4, scoped, tag = 'scoped memory for tpu_custom_call.1']
    #allocation11 [shape = 'u8[16384]{0}', space=vmem, size = 0x4000, scoped, tag = 'input window, operand 3, single buffered']
    #allocation12 [shape = 'u8[8192]{0}', space=vmem, size = 0x2000, scoped, tag = 'output window, operand 0, single buffered']
    %10 = vsyncpa [#allocation7], 0
    %11 = vsyncpa [#allocation10], 0
    %12 = vsyncpa [#allocation8], 0
    // Predicated region
    $region2: #{tpu_custom_call.1} parent=1 // pred_check
      _
    $region3: #{tpu_custom_call.1} parent=1 // pred_check_branch
      %14 = sbr.rel (0) target = $region5
    $region4: #{tpu_custom_call.1} parent=1 // pred_region
      %s16 = ssub.s32 256, 256
      %17 = vsyncadd [#allocation7], %s16
      %s18 = sshll.u32 [#allocation6], 4
      %s19 = int_to_ptr.vmem [resolvable:$true] %s18
      %24 = dma.hbm_to_vmem [thread:$0]  %s0, 256, %s19, [#allocation7], 128, 128, 8
    $region5: #{tpu_custom_call.1} parent=1 // pred_fallthru
      _
    // Predicated region
    $region6: #{tpu_custom_call.1} parent=1 // pred_check
      _
    $region7: #{tpu_custom_call.1} parent=1 // pred_check_branch
      %26 = sbr.rel (0) target = $region9
    $region8: #{tpu_custom_call.1} parent=1 // pred_region
      %s28 = ssub.s32 512, 512
      %29 = vsyncadd [#allocation10], %s28
      %s30 = sshll.u32 [#allocation9], 4
      %s31 = int_to_ptr.vmem [resolvable:$true] %s30
      %36 = dma.hbm_to_vmem [thread:$0]  %s1, 512, %s31, [#allocation10], 128, 128, 8
    $region9: #{tpu_custom_call.1} parent=1 // pred_fallthru
      _
    // Predicated region
    $region10: #{tpu_custom_call.1} parent=1 // pred_check
      _
    $region11: #{tpu_custom_call.1} parent=1 // pred_check_branch
      %38 = sbr.rel (0) target = $region13
    $region12: #{tpu_custom_call.1} parent=1 // pred_region
      _
    $region13: #{tpu_custom_call.1} parent=1 // pred_fallthru
      _
    // Predicated region
    $region14: #{tpu_custom_call.1} parent=1 // pred_check
      _
    $region15: #{tpu_custom_call.1} parent=1 // pred_check_branch
      %40 = sbr.rel (0) target = $region17
    $region16: #{tpu_custom_call.1} parent=1 // pred_region
      %s42 = ssub.s32 512, 512
      %43 = vsyncadd [#allocation10], %s42
      %s44 = sshll.u32 [#allocation11], 4
      %s45 = int_to_ptr.vmem [resolvable:$true] %s44
      %50 = dma.hbm_to_vmem [thread:$0]  %s3, 512, %s45, [#allocation10], 128, 128, 8
    $region17: #{tpu_custom_call.1} parent=1 // pred_fallthru
      _
    // Predicated region
    $region18: #{tpu_custom_call.1} parent=1 // pred_check
      _
    $region19: #{tpu_custom_call.1} parent=1 // pred_check_branch
      %52 = sbr.rel (0) target = $region21
    $region20: #{tpu_custom_call.1} parent=1 // pred_region
      _
    $region21: #{tpu_custom_call.1} parent=1 // pred_fallthru
      _
    // Predicated region
    $region22: #{tpu_custom_call.1} parent=1 // pred_check
      _
    $region23: #{tpu_custom_call.1} parent=1 // pred_check_branch
      %54 = sbr.rel (0) target = $region25
    $region24: #{tpu_custom_call.1} parent=1 // pred_region
      %55 = dma.done [#allocation7], 256
    $region25: #{tpu_custom_call.1} parent=1 // pred_fallthru
      _
    // Predicated region
    $region26: #{tpu_custom_call.1} parent=1 // pred_check
      _
    $region27: #{tpu_custom_call.1} parent=1 // pred_check_branch
      %57 = sbr.rel (0) target = $region29
    $region28: #{tpu_custom_call.1} parent=1 // pred_region
      %58 = dma.done [#allocation10], 512
    $region29: #{tpu_custom_call.1} parent=1 // pred_fallthru
      _
    // Predicated region
    $region30: #{tpu_custom_call.1} parent=1 // pred_check
      _
    $region31: #{tpu_custom_call.1} parent=1 // pred_check_branch
      %60 = sbr.rel (0) target = $region33
    $region32: #{tpu_custom_call.1} parent=1 // pred_region
      %61 = dma.done [#allocation10], 512
    $region33: #{tpu_custom_call.1} parent=1 // pred_fallthru
      _
    %v62 = vld [vmem:[#allocation6] sm:$0xff]
    %v63 = vld [vmem:[#allocation6 + $0x8] sm:$0xff]
    %v64 = vld [vmem:[#allocation9] sm:$0xff]
    %v65 = vld [vmem:[#allocation9 + $0x8] sm:$0xff]
    %v66 = vld [vmem:[#allocation9 + $0x10] sm:$0xff]
    %v67 = vld [vmem:[#allocation9 + $0x18] sm:$0xff]
    %v68 = vld [vmem:[%s2] sm:$0x1]
    %v70 = vlaneseq
    %v71 = vshrl.u32 %v70, 7
    %v72 = vsub.s32 0, %v71
    %v73 = vrot.slane %v68, %v72
    %vm75 = vcmask 261120
    %v77 = vsel %vm75, %v62, 0
    %v80 = vsel %vm75, %v63, 0
    %82 = vmatprep.subr.mxu0 0.0
    %83 = vmatpush1.msra.mxu0 %v64
    %84 = vmatprep.subr.mxu0 0.0
    %85 = vmatpush1.msra.mxu0 %v65
    %86 = vmatprep.subr.mxu0 0.0
    %87 = vmatpush1.msra.mxu0 %v66
    %88 = vmatprep.subr.mxu0 0.0
    %89 = vmatpush1.msra.mxu0 %v67
    %90 = vmatprep.subr.mxu0 0.0
    %91 = vmatpush1.msra.mxu0 0.0
    %92 = vmatprep.subr.mxu0 0.0
    %93 = vmatpush1.msra.mxu0 0.0
    %94 = vmatprep.subr.mxu0 0.0
    %95 = vmatpush1.msra.mxu0 0.0
    %96 = vmatprep.subr.mxu0 0.0
    %97 = vmatpush1.msra.mxu0 0.0
    %98 = vmatprep.subr.mxu0 0.0
    %99 = vmatpush1.msra.mxu0 0.0
    %100 = vmatprep.subr.mxu0 0.0
    %101 = vmatpush1.msra.mxu0 0.0
    %102 = vmatprep.subr.mxu0 0.0
    %103 = vmatpush1.msra.mxu0 0.0
    %104 = vmatprep.subr.mxu0 0.0
    %105 = vmatpush1.msra.mxu0 0.0
    %106 = vmatprep.subr.mxu0 0.0
    %107 = vmatpush1.msra.mxu0 0.0
    %108 = vmatprep.subr.mxu0 0.0
    %109 = vmatpush1.msra.mxu0 0.0
    %110 = vmatprep.subr.mxu0 0.0
    %111 = vmatpush1.msra.mxu0 0.0
    %112 = vmatprep.subr.mxu0 0.0
    %113 = vmatpush1.msra.mxu0 0.0
    %114 = vmatprep.subr.mxu0 0.0
    %115 = vmatpush1.msra.mxu0 0.0
    %116 = vmatprep.subr.mxu0 0.0
    %117 = vmatpush1.msra.mxu0 0.0
    %118 = vmatprep.subr.mxu0 0.0
    %119 = vmatpush1.msra.mxu0 0.0
    %120 = vmatprep.subr.mxu0 0.0
    %121 = vmatpush1.msra.mxu0 0.0
    %122 = vmatprep.subr.mxu0 0.0
    %123 = vmatpush1.msra.mxu0 0.0
    %124 = vmatprep.subr.mxu0 0.0
    %125 = vmatpush1.msra.mxu0 0.0
    %126 = vmatprep.subr.mxu0 0.0
    %127 = vmatpush1.msra.mxu0 0.0
    %128 = vmatprep.subr.mxu0 0.0
    %129 = vmatpush1.msra.mxu0 0.0
    %130 = vmatprep.subr.mxu0 0.0
    %131 = vmatpush1.msra.mxu0 0.0
    %132 = vmatprep.subr.mxu0 0.0
    %133 = vmatpush1.msra.mxu0 0.0
    %134 = vmatprep.subr.mxu0 0.0
    %135 = vmatpush1.msra.mxu0 0.0
    %136 = vmatprep.subr.mxu0 0.0
    %137 = vmatpush1.msra.mxu0 0.0
    %138 = vmatprep.subr.mxu0 0.0
    %139 = vmatpush1.msra.mxu0 0.0
    %140 = vmatprep.subr.mxu0 0.0
    %141 = vmatpush1.msra.mxu0 0.0
    %142 = vmatprep.subr.mxu0 0.0
    %143 = vmatpush1.msra.mxu0 0.0
    %144 = vmatprep.subr.mxu0 0.0
    %145 = vmatpush1.msra.mxu0 0.0
    %146 = vmatprep.mubr.f32.mxu0 0.0
    %147 = vmatmul.mubr.f32.gmra.mrb[0].mxu0 %v77
    %v148 = vpop.f32.mrb[0].mxu0
    %v149 = vadd.f32 %v73, %v148
    %v150 = vpop.f32.mrb[0].mxu0
    %151 = vmatprep.mubr.f32.mxu0 0.0
    %152 = vmatmul.mubr.f32.gmra.mrb[0].mxu0 %v80
    %v153 = vpop.f32.mrb[0].mxu0
    %v154 = vadd.f32 %v73, %v153
    %v155 = vpop.f32.mrb[0].mxu0
    %156 = vdwg.mxu0
    %vm157 = vcmask 64512
    %158 = vst.msk [vmem:[#allocation2] sm:$0xff] %vm157, %v149
    %160 = vrot.lane.b32.xlu0 %v149, 96
    %v161 = vpop.permute.xlu0 %160
    %163 = vst.msk [vmem:[#allocation3] sm:$0xff] %vm157, %v161
    %164 = vrot.lane.b32.xlu0 %v149, 64
    %v165 = vpop.permute.xlu0 %164
    %167 = vst.msk [vmem:[#allocation4] sm:$0xff] %vm157, %v165
    %168 = vrot.lane.b32.xlu0 %v149, 120
    %v169 = vpop.permute.xlu0 %168
    %s171 = scalar_lea.vmem [#allocation2], 8
    %172 = vst.msk [vmem:[%s171] sm:$0xff] %vm157, %v169
    %173 = vrot.lane.b32.xlu0 %v149, 88
    %v174 = vpop.permute.xlu0 %173
    %s176 = scalar_lea.vmem [#allocation3], 8
    %177 = vst.msk [vmem:[%s176] sm:$0xff] %vm157, %v174
    %178 = vrot.lane.b32.xlu0 %v149, 56
    %v179 = vpop.permute.xlu0 %178
    %s181 = scalar_lea.vmem [#allocation4], 8
    %182 = vst.msk [vmem:[%s181] sm:$0xff] %vm157, %v179
    %183 = vrot.lane.b32.xlu0 %v149, 112
    %v184 = vpop.permute.xlu0 %183
    %s186 = scalar_lea.vmem [#allocation2], 16
    %187 = vst.msk [vmem:[%s186] sm:$0xff] %vm157, %v184
    %188 = vrot.lane.b32.xlu0 %v149, 80
    %v189 = vpop.permute.xlu0 %188
    %s191 = scalar_lea.vmem [#allocation3], 16
    %192 = vst.msk [vmem:[%s191] sm:$0xff] %vm157, %v189
    %193 = vrot.lane.b32.xlu0 %v149, 48
    %v194 = vpop.permute.xlu0 %193
    %s196 = scalar_lea.vmem [#allocation4], 16
    %197 = vst.msk [vmem:[%s196] sm:$0xff] %vm157, %v194
    %198 = vrot.lane.b32.xlu0 %v149, 104
    %v199 = vpop.permute.xlu0 %198
    %s201 = scalar_lea.vmem [#allocation2], 24
    %202 = vst.msk [vmem:[%s201] sm:$0xff] %vm157, %v199
    %203 = vrot.lane.b32.xlu0 %v149, 72
    %v204 = vpop.permute.xlu0 %203
    %s206 = scalar_lea.vmem [#allocation3], 24
    %207 = vst.msk [vmem:[%s206] sm:$0xff] %vm157, %v204
    %208 = vrot.lane.b32.xlu0 %v149, 40
    %v209 = vpop.permute.xlu0 %208
    %s211 = scalar_lea.vmem [#allocation4], 24
    %212 = vst.msk [vmem:[%s211] sm:$0xff] %vm157, %v209
    %s213 = scalar_lea.vmem [#allocation2], 32
    %214 = vst.msk [vmem:[%s213] sm:$0xff] %vm157, %v154
    %216 = vrot.lane.b32.xlu0 %v154, 96
    %v217 = vpop.permute.xlu0 %216
    %s219 = scalar_lea.vmem [#allocation3], 32
    %220 = vst.msk [vmem:[%s219] sm:$0xff] %vm157, %v217
    %221 = vrot.lane.b32.xlu0 %v154, 64
    %v222 = vpop.permute.xlu0 %221
    %s224 = scalar_lea.vmem [#allocation4], 32
    %225 = vst.msk [vmem:[%s224] sm:$0xff] %vm157, %v222
    %226 = vrot.lane.b32.xlu0 %v154, 120
    %v227 = vpop.permute.xlu0 %226
    %s229 = scalar_lea.vmem [#allocation2], 40
    %230 = vst.msk [vmem:[%s229] sm:$0xff] %vm157, %v227
    %231 = vrot.lane.b32.xlu0 %v154, 88
    %v232 = vpop.permute.xlu0 %231
    %s234 = scalar_lea.vmem [#allocation3], 40
    %235 = vst.msk [vmem:[%s234] sm:$0xff] %vm157, %v232
    %236 = vrot.lane.b32.xlu0 %v154, 56
    %v237 = vpop.permute.xlu0 %236
    %s239 = scalar_lea.vmem [#allocation4], 40
    %240 = vst.msk [vmem:[%s239] sm:$0xff] %vm157, %v237
    %241 = vrot.lane.b32.xlu0 %v154, 112
    %v242 = vpop.permute.xlu0 %241
    %s244 = scalar_lea.vmem [#allocation2], 48
    %245 = vst.msk [vmem:[%s244] sm:$0xff] %vm157, %v242
    %246 = vrot.lane.b32.xlu0 %v154, 80
    %v247 = vpop.permute.xlu0 %246
    %s249 = scalar_lea.vmem [#allocation3], 48
    %250 = vst.msk [vmem:[%s249] sm:$0xff] %vm157, %v247
    %251 = vrot.lane.b32.xlu0 %v154, 48
    %v252 = vpop.permute.xlu0 %251
    %s254 = scalar_lea.vmem [#allocation4], 48
    %255 = vst.msk [vmem:[%s254] sm:$0xff] %vm157, %v252
    %256 = vrot.lane.b32.xlu0 %v154, 104
    %v257 = vpop.permute.xlu0 %256
    %s259 = scalar_lea.vmem [#allocation2], 56
    %260 = vst.msk [vmem:[%s259] sm:$0xff] %vm157, %v257
    %261 = vrot.lane.b32.xlu0 %v154, 72
    %v262 = vpop.permute.xlu0 %261
    %s264 = scalar_lea.vmem [#allocation3], 56
    %265 = vst.msk [vmem:[%s264] sm:$0xff] %vm157, %v262
    %266 = vrot.lane.b32.xlu0 %v154, 40
    %v267 = vpop.permute.xlu0 %266
    %s269 = scalar_lea.vmem [#allocation4], 56
    %270 = vst.msk [vmem:[%s269] sm:$0xff] %vm157, %v267
    %v271 = vld [vmem:[#allocation2] sm:$0xff]
    %v272 = vld [vmem:[#allocation2 + $0x8] sm:$0xff]
    %v273 = vld [vmem:[#allocation2 + $0x10] sm:$0xff]
    %v274 = vld [vmem:[#allocation2 + $0x18] sm:$0xff]
    %v275 = vld [vmem:[#allocation2 + $0x20] sm:$0xff]
    %v276 = vld [vmem:[#allocation2 + $0x28] sm:$0xff]
    %v277 = vld [vmem:[#allocation2 + $0x30] sm:$0xff]
    %v278 = vld [vmem:[#allocation2 + $0x38] sm:$0xff]
    %v279 = vld [vmem:[#allocation3] sm:$0xff]
    %v280 = vld [vmem:[#allocation3 + $0x8] sm:$0xff]
    %v281 = vld [vmem:[#allocation3 + $0x10] sm:$0xff]
    %v282 = vld [vmem:[#allocation3 + $0x18] sm:$0xff]
    %v283 = vld [vmem:[#allocation3 + $0x20] sm:$0xff]
    %v284 = vld [vmem:[#allocation3 + $0x28] sm:$0xff]
    %v285 = vld [vmem:[#allocation3 + $0x30] sm:$0xff]
    %v286 = vld [vmem:[#allocation3 + $0x38] sm:$0xff]
    %v287 = vld [vmem:[#allocation4] sm:$0xff]
    %v288 = vld [vmem:[#allocation4 + $0x8] sm:$0xff]
    %v289 = vld [vmem:[#allocation4 + $0x10] sm:$0xff]
    %v290 = vld [vmem:[#allocation4 + $0x18] sm:$0xff]
    %v291 = vld [vmem:[#allocation4 + $0x20] sm:$0xff]
    %v292 = vld [vmem:[#allocation4 + $0x28] sm:$0xff]
    %v293 = vld [vmem:[#allocation4 + $0x30] sm:$0xff]
    %v294 = vld [vmem:[#allocation4 + $0x38] sm:$0xff]
    %v296 = vsel %vm157, %v271, 0
    %v299 = vsel %vm157, %v279, 0
    %301 = vmatprep.subr.mxu0 0.0
    %302 = vmatpush1.xpose.msra.mxu0 %v299
    %303 = vmatprep.subr.mxu0 0.0
    %304 = vmatpush1.xpose.msra.mxu0 0.0
    %305 = vmatprep.subr.mxu0 0.0
    %306 = vmatpush1.xpose.msra.mxu0 0.0
    %307 = vmatprep.subr.mxu0 0.0
    %308 = vmatpush1.xpose.msra.mxu0 0.0
    %309 = vmatprep.subr.mxu0 0.0
    %310 = vmatpush1.xpose.msra.mxu0 0.0
    %311 = vmatprep.subr.mxu0 0.0
    %312 = vmatpush1.xpose.msra.mxu0 0.0
    %313 = vmatprep.subr.mxu0 0.0
    %314 = vmatpush1.xpose.msra.mxu0 0.0
    %315 = vmatprep.subr.mxu0 0.0
    %316 = vmatpush1.xpose.msra.mxu0 0.0
    %317 = vmatprep.subr.mxu0 0.0
    %318 = vmatpush1.xpose.msra.mxu0 0.0
    %319 = vmatprep.subr.mxu0 0.0
    %320 = vmatpush1.xpose.msra.mxu0 0.0
    %321 = vmatprep.subr.mxu0 0.0
    %322 = vmatpush1.xpose.msra.mxu0 0.0
    %323 = vmatprep.subr.mxu0 0.0
    %324 = vmatpush1.xpose.msra.mxu0 0.0
    %325 = vmatprep.subr.mxu0 0.0
    %326 = vmatpush1.xpose.msra.mxu0 0.0
    %327 = vmatprep.subr.mxu0 0.0
    %328 = vmatpush1.xpose.msra.mxu0 0.0
    %329 = vmatprep.subr.mxu0 0.0
    %330 = vmatpush1.xpose.msra.mxu0 0.0
    %331 = vmatprep.subr.mxu0 0.0
    %332 = vmatpush1.xpose.msra.mxu0 0.0
    %333 = vmatprep.subr.mxu0 0.0
    %334 = vmatpush1.xpose.msra.mxu0 0.0
    %335 = vmatprep.subr.mxu0 0.0
    %336 = vmatpush1.xpose.msra.mxu0 0.0
    %337 = vmatprep.subr.mxu0 0.0
    %338 = vmatpush1.xpose.msra.mxu0 0.0
    %339 = vmatprep.subr.mxu0 0.0
    %340 = vmatpush1.xpose.msra.mxu0 0.0
    %341 = vmatprep.subr.mxu0 0.0
    %342 = vmatpush1.xpose.msra.mxu0 0.0
    %343 = vmatprep.subr.mxu0 0.0
    %344 = vmatpush1.xpose.msra.mxu0 0.0
    %345 = vmatprep.subr.mxu0 0.0
    %346 = vmatpush1.xpose.msra.mxu0 0.0
    %347 = vmatprep.subr.mxu0 0.0
    %348 = vmatpush1.xpose.msra.mxu0 0.0
    %349 = vmatprep.subr.mxu0 0.0
    %350 = vmatpush1.xpose.msra.mxu0 0.0
    %351 = vmatprep.subr.mxu0 0.0
    %352 = vmatpush1.xpose.msra.mxu0 0.0
    %353 = vmatprep.subr.mxu0 0.0
    %354 = vmatpush1.xpose.msra.mxu0 0.0
    %355 = vmatprep.subr.mxu0 0.0
    %356 = vmatpush1.xpose.msra.mxu0 0.0
    %357 = vmatprep.subr.mxu0 0.0
    %358 = vmatpush1.xpose.msra.mxu0 0.0
    %359 = vmatprep.subr.mxu0 0.0
    %360 = vmatpush1.xpose.msra.mxu0 0.0
    %361 = vmatprep.subr.mxu0 0.0
    %362 = vmatpush1.xpose.msra.mxu0 0.0
    %363 = vmatprep.subr.mxu0 0.0
    %364 = vmatpush1.xpose.msra.mxu0 0.0
    %365 = vmatprep.mubr.f32.mxu0 0.0
    %366 = vmatmul.mubr.f32.gmra.mrb[0].mxu0 %v296
    %v367 = vpop.f32.mrb[0].mxu0
    %v368 = vadd.f32 0.0, %v367
    %v369 = vpop.f32.mrb[0].mxu0
    %370 = vdwg.mxu0
    %v372 = vsel %vm157, %v272, 0
    %v375 = vsel %vm157, %v280, 0
    %377 = vmatprep.subr.mxu0 0.0
    %378 = vmatpush1.xpose.msra.mxu0 %v375
    %379 = vmatprep.subr.mxu0 0.0
    %380 = vmatpush1.xpose.msra.mxu0 0.0
    %381 = vmatprep.subr.mxu0 0.0
    %382 = vmatpush1.xpose.msra.mxu0 0.0
    %383 = vmatprep.subr.mxu0 0.0
    %384 = vmatpush1.xpose.msra.mxu0 0.0
    %385 = vmatprep.subr.mxu0 0.0
    %386 = vmatpush1.xpose.msra.mxu0 0.0
    %387 = vmatprep.subr.mxu0 0.0
    %388 = vmatpush1.xpose.msra.mxu0 0.0
    %389 = vmatprep.subr.mxu0 0.0
    %390 = vmatpush1.xpose.msra.mxu0 0.0
    %391 = vmatprep.subr.mxu0 0.0
    %392 = vmatpush1.xpose.msra.mxu0 0.0
    %393 = vmatprep.subr.mxu0 0.0
    %394 = vmatpush1.xpose.msra.mxu0 0.0
    %395 = vmatprep.subr.mxu0 0.0
    %396 = vmatpush1.xpose.msra.mxu0 0.0
    %397 = vmatprep.subr.mxu0 0.0
    %398 = vmatpush1.xpose.msra.mxu0 0.0
    %399 = vmatprep.subr.mxu0 0.0
    %400 = vmatpush1.xpose.msra.mxu0 0.0
    %401 = vmatprep.subr.mxu0 0.0
    %402 = vmatpush1.xpose.msra.mxu0 0.0
    %403 = vmatprep.subr.mxu0 0.0
    %404 = vmatpush1.xpose.msra.mxu0 0.0
    %405 = vmatprep.subr.mxu0 0.0
    %406 = vmatpush1.xpose.msra.mxu0 0.0
    %407 = vmatprep.subr.mxu0 0.0
    %408 = vmatpush1.xpose.msra.mxu0 0.0
    %409 = vmatprep.subr.mxu0 0.0
    %410 = vmatpush1.xpose.msra.mxu0 0.0
    %411 = vmatprep.subr.mxu0 0.0
    %412 = vmatpush1.xpose.msra.mxu0 0.0
    %413 = vmatprep.subr.mxu0 0.0
    %414 = vmatpush1.xpose.msra.mxu0 0.0
    %415 = vmatprep.subr.mxu0 0.0
    %416 = vmatpush1.xpose.msra.mxu0 0.0
    %417 = vmatprep.subr.mxu0 0.0
    %418 = vmatpush1.xpose.msra.mxu0 0.0
    %419 = vmatprep.subr.mxu0 0.0
    %420 = vmatpush1.xpose.msra.mxu0 0.0
    %421 = vmatprep.subr.mxu0 0.0
    %422 = vmatpush1.xpose.msra.mxu0 0.0
    %423 = vmatprep.subr.mxu0 0.0
    %424 = vmatpush1.xpose.msra.mxu0 0.0
    %425 = vmatprep.subr.mxu0 0.0
    %426 = vmatpush1.xpose.msra.mxu0 0.0
    %427 = vmatprep.subr.mxu0 0.0
    %428 = vmatpush1.xpose.msra.mxu0 0.0
    %429 = vmatprep.subr.mxu0 0.0
    %430 = vmatpush1.xpose.msra.mxu0 0.0
    %431 = vmatprep.subr.mxu0 0.0
    %432 = vmatpush1.xpose.msra.mxu0 0.0
    %433 = vmatprep.subr.mxu0 0.0
    %434 = vmatpush1.xpose.msra.mxu0 0.0
    %435 = vmatprep.subr.mxu0 0.0
    %436 = vmatpush1.xpose.msra.mxu0 0.0
    %437 = vmatprep.subr.mxu0 0.0
    %438 = vmatpush1.xpose.msra.mxu0 0.0
    %439 = vmatprep.subr.mxu0 0.0
    %440 = vmatpush1.xpose.msra.mxu0 0.0
    %441 = vmatprep.mubr.f32.mxu0 0.0
    %442 = vmatmul.mubr.f32.gmra.mrb[0].mxu0 %v372
    %v443 = vpop.f32.mrb[0].mxu0
    %v444 = vadd.f32 0.0, %v443
    %v445 = vpop.f32.mrb[0].mxu0
    %446 = vdwg.mxu0
    %v448 = vsel %vm157, %v273, 0
    %v451 = vsel %vm157, %v281, 0
    %453 = vmatprep.subr.mxu0 0.0
    %454 = vmatpush1.xpose.msra.mxu0 %v451
    %455 = vmatprep.subr.mxu0 0.0
    %456 = vmatpush1.xpose.msra.mxu0 0.0
    %457 = vmatprep.subr.mxu0 0.0
    %458 = vmatpush1.xpose.msra.mxu0 0.0
    %459 = vmatprep.subr.mxu0 0.0
    %460 = vmatpush1.xpose.msra.mxu0 0.0
    %461 = vmatprep.subr.mxu0 0.0
    %462 = vmatpush1.xpose.msra.mxu0 0.0
    %463 = vmatprep.subr.mxu0 0.0
    %464 = vmatpush1.xpose.msra.mxu0 0.0
    %465 = vmatprep.subr.mxu0 0.0
    %466 = vmatpush1.xpose.msra.mxu0 0.0
    %467 = vmatprep.subr.mxu0 0.0
    %468 = vmatpush1.xpose.msra.mxu0 0.0
    %469 = vmatprep.subr.mxu0 0.0
    %470 = vmatpush1.xpose.msra.mxu0 0.0
    %471 = vmatprep.subr.mxu0 0.0
    %472 = vmatpush1.xpose.msra.mxu0 0.0
    %473 = vmatprep.subr.mxu0 0.0
    %474 = vmatpush1.xpose.msra.mxu0 0.0
    %475 = vmatprep.subr.mxu0 0.0
    %476 = vmatpush1.xpose.msra.mxu0 0.0
    %477 = vmatprep.subr.mxu0 0.0
    %478 = vmatpush1.xpose.msra.mxu0 0.0
    %479 = vmatprep.subr.mxu0 0.0
    %480 = vmatpush1.xpose.msra.mxu0 0.0
    %481 = vmatprep.subr.mxu0 0.0
    %482 = vmatpush1.xpose.msra.mxu0 0.0
    %483 = vmatprep.subr.mxu0 0.0
    %484 = vmatpush1.xpose.msra.mxu0 0.0
    %485 = vmatprep.subr.mxu0 0.0
    %486 = vmatpush1.xpose.msra.mxu0 0.0
    %487 = vmatprep.subr.mxu0 0.0
    %488 = vmatpush1.xpose.msra.mxu0 0.0
    %489 = vmatprep.subr.mxu0 0.0
    %490 = vmatpush1.xpose.msra.mxu0 0.0
    %491 = vmatprep.subr.mxu0 0.0
    %492 = vmatpush1.xpose.msra.mxu0 0.0
    %493 = vmatprep.subr.mxu0 0.0
    %494 = vmatpush1.xpose.msra.mxu0 0.0
    %495 = vmatprep.subr.mxu0 0.0
    %496 = vmatpush1.xpose.msra.mxu0 0.0
    %497 = vmatprep.subr.mxu0 0.0
    %498 = vmatpush1.xpose.msra.mxu0 0.0
    %499 = vmatprep.subr.mxu0 0.0
    %500 = vmatpush1.xpose.msra.mxu0 0.0
    %501 = vmatprep.subr.mxu0 0.0
    %502 = vmatpush1.xpose.msra.mxu0 0.0
    %503 = vmatprep.subr.mxu0 0.0
    %504 = vmatpush1.xpose.msra.mxu0 0.0
    %505 = vmatprep.subr.mxu0 0.0
    %506 = vmatpush1.xpose.msra.mxu0 0.0
    %507 = vmatprep.subr.mxu0 0.0
    %508 = vmatpush1.xpose.msra.mxu0 0.0
    %509 = vmatprep.subr.mxu0 0.0
    %510 = vmatpush1.xpose.msra.mxu0 0.0
    %511 = vmatprep.subr.mxu0 0.0
    %512 = vmatpush1.xpose.msra.mxu0 0.0
    %513 = vmatprep.subr.mxu0 0.0
    %514 = vmatpush1.xpose.msra.mxu0 0.0
    %515 = vmatprep.subr.mxu0 0.0
    %516 = vmatpush1.xpose.msra.mxu0 0.0
    %517 = vmatprep.mubr.f32.mxu0 0.0
    %518 = vmatmul.mubr.f32.gmra.mrb[0].mxu0 %v448
    %v519 = vpop.f32.mrb[0].mxu0
    %v520 = vadd.f32 0.0, %v519
    %v521 = vpop.f32.mrb[0].mxu0
    %522 = vdwg.mxu0
    %v524 = vsel %vm157, %v274, 0
    %v527 = vsel %vm157, %v282, 0
    %529 = vmatprep.subr.mxu0 0.0
    %530 = vmatpush1.xpose.msra.mxu0 %v527
    %531 = vmatprep.subr.mxu0 0.0
    %532 = vmatpush1.xpose.msra.mxu0 0.0
    %533 = vmatprep.subr.mxu0 0.0
    %534 = vmatpush1.xpose.msra.mxu0 0.0
    %535 = vmatprep.subr.mxu0 0.0
    %536 = vmatpush1.xpose.msra.mxu0 0.0
    %537 = vmatprep.subr.mxu0 0.0
    %538 = vmatpush1.xpose.msra.mxu0 0.0
    %539 = vmatprep.subr.mxu0 0.0
    %540 = vmatpush1.xpose.msra.mxu0 0.0
    %541 = vmatprep.subr.mxu0 0.0
    %542 = vmatpush1.xpose.msra.mxu0 0.0
    %543 = vmatprep.subr.mxu0 0.0
    %544 = vmatpush1.xpose.msra.mxu0 0.0
    %545 = vmatprep.subr.mxu0 0.0
    %546 = vmatpush1.xpose.msra.mxu0 0.0
    %547 = vmatprep.subr.mxu0 0.0
    %548 = vmatpush1.xpose.msra.mxu0 0.0
    %549 = vmatprep.subr.mxu0 0.0
    %550 = vmatpush1.xpose.msra.mxu0 0.0
    %551 = vmatprep.subr.mxu0 0.0
    %552 = vmatpush1.xpose.msra.mxu0 0.0
    %553 = vmatprep.subr.mxu0 0.0
    %554 = vmatpush1.xpose.msra.mxu0 0.0
    %555 = vmatprep.subr.mxu0 0.0
    %556 = vmatpush1.xpose.msra.mxu0 0.0
    %557 = vmatprep.subr.mxu0 0.0
    %558 = vmatpush1.xpose.msra.mxu0 0.0
    %559 = vmatprep.subr.mxu0 0.0
    %560 = vmatpush1.xpose.msra.mxu0 0.0
    %561 = vmatprep.subr.mxu0 0.0
    %562 = vmatpush1.xpose.msra.mxu0 0.0
    %563 = vmatprep.subr.mxu0 0.0
    %564 = vmatpush1.xpose.msra.mxu0 0.0
    %565 = vmatprep.subr.mxu0 0.0
    %566 = vmatpush1.xpose.msra.mxu0 0.0
    %567 = vmatprep.subr.mxu0 0.0
    %568 = vmatpush1.xpose.msra.mxu0 0.0
    %569 = vmatprep.subr.mxu0 0.0
    %570 = vmatpush1.xpose.msra.mxu0 0.0
    %571 = vmatprep.subr.mxu0 0.0
    %572 = vmatpush1.xpose.msra.mxu0 0.0
    %573 = vmatprep.subr.mxu0 0.0
    %574 = vmatpush1.xpose.msra.mxu0 0.0
    %575 = vmatprep.subr.mxu0 0.0
    %576 = vmatpush1.xpose.msra.mxu0 0.0
    %577 = vmatprep.subr.mxu0 0.0
    %578 = vmatpush1.xpose.msra.mxu0 0.0
    %579 = vmatprep.subr.mxu0 0.0
    %580 = vmatpush1.xpose.msra.mxu0 0.0
    %581 = vmatprep.subr.mxu0 0.0
    %582 = vmatpush1.xpose.msra.mxu0 0.0
    %583 = vmatprep.subr.mxu0 0.0
    %584 = vmatpush1.xpose.msra.mxu0 0.0
    %585 = vmatprep.subr.mxu0 0.0
    %586 = vmatpush1.xpose.msra.mxu0 0.0
    %587 = vmatprep.subr.mxu0 0.0
    %588 = vmatpush1.xpose.msra.mxu0 0.0
    %589 = vmatprep.subr.mxu0 0.0
    %590 = vmatpush1.xpose.msra.mxu0 0.0
    %591 = vmatprep.subr.mxu0 0.0
    %592 = vmatpush1.xpose.msra.mxu0 0.0
    %593 = vmatprep.mubr.f32.mxu0 0.0
    %594 = vmatmul.mubr.f32.gmra.mrb[0].mxu0 %v524
    %v595 = vpop.f32.mrb[0].mxu0
    %v596 = vadd.f32 0.0, %v595
    %v597 = vpop.f32.mrb[0].mxu0
    %598 = vdwg.mxu0
    %v600 = vsel %vm157, %v275, 0
    %v603 = vsel %vm157, %v283, 0
    %605 = vmatprep.subr.mxu0 0.0
    %606 = vmatpush1.xpose.msra.mxu0 %v603
    %607 = vmatprep.subr.mxu0 0.0
    %608 = vmatpush1.xpose.msra.mxu0 0.0
    %609 = vmatprep.subr.mxu0 0.0
    %610 = vmatpush1.xpose.msra.mxu0 0.0
    %611 = vmatprep.subr.mxu0 0.0
    %612 = vmatpush1.xpose.msra.mxu0 0.0
    %613 = vmatprep.subr.mxu0 0.0
    %614 = vmatpush1.xpose.msra.mxu0 0.0
    %615 = vmatprep.subr.mxu0 0.0
    %616 = vmatpush1.xpose.msra.mxu0 0.0
    %617 = vmatprep.subr.mxu0 0.0
    %618 = vmatpush1.xpose.msra.mxu0 0.0
    %619 = vmatprep.subr.mxu0 0.0
    %620 = vmatpush1.xpose.msra.mxu0 0.0
    %621 = vmatprep.subr.mxu0 0.0
    %622 = vmatpush1.xpose.msra.mxu0 0.0
    %623 = vmatprep.subr.mxu0 0.0
    %624 = vmatpush1.xpose.msra.mxu0 0.0
    %625 = vmatprep.subr.mxu0 0.0
    %626 = vmatpush1.xpose.msra.mxu0 0.0
    %627 = vmatprep.subr.mxu0 0.0
    %628 = vmatpush1.xpose.msra.mxu0 0.0
    %629 = vmatprep.subr.mxu0 0.0
    %630 = vmatpush1.xpose.msra.mxu0 0.0
    %631 = vmatprep.subr.mxu0 0.0
    %632 = vmatpush1.xpose.msra.mxu0 0.0
    %633 = vmatprep.subr.mxu0 0.0
    %634 = vmatpush1.xpose.msra.mxu0 0.0
    %635 = vmatprep.subr.mxu0 0.0
    %636 = vmatpush1.xpose.msra.mxu0 0.0
    %637 = vmatprep.subr.mxu0 0.0
    %638 = vmatpush1.xpose.msra.mxu0 0.0
    %639 = vmatprep.subr.mxu0 0.0
    %640 = vmatpush1.xpose.msra.mxu0 0.0
    %641 = vmatprep.subr.mxu0 0.0
    %642 = vmatpush1.xpose.msra.mxu0 0.0
    %643 = vmatprep.subr.mxu0 0.0
    %644 = vmatpush1.xpose.msra.mxu0 0.0
    %645 = vmatprep.subr.mxu0 0.0
    %646 = vmatpush1.xpose.msra.mxu0 0.0
    %647 = vmatprep.subr.mxu0 0.0
    %648 = vmatpush1.xpose.msra.mxu0 0.0
    %649 = vmatprep.subr.mxu0 0.0
    %650 = vmatpush1.xpose.msra.mxu0 0.0
    %651 = vmatprep.subr.mxu0 0.0
    %652 = vmatpush1.xpose.msra.mxu0 0.0
    %653 = vmatprep.subr.mxu0 0.0
    %654 = vmatpush1.xpose.msra.mxu0 0.0
    %655 = vmatprep.subr.mxu0 0.0
    %656 = vmatpush1.xpose.msra.mxu0 0.0
    %657 = vmatprep.subr.mxu0 0.0
    %658 = vmatpush1.xpose.msra.mxu0 0.0
    %659 = vmatprep.subr.mxu0 0.0
    %660 = vmatpush1.xpose.msra.mxu0 0.0
    %661 = vmatprep.subr.mxu0 0.0
    %662 = vmatpush1.xpose.msra.mxu0 0.0
    %663 = vmatprep.subr.mxu0 0.0
    %664 = vmatpush1.xpose.msra.mxu0 0.0
    %665 = vmatprep.subr.mxu0 0.0
    %666 = vmatpush1.xpose.msra.mxu0 0.0
    %667 = vmatprep.subr.mxu0 0.0
    %668 = vmatpush1.xpose.msra.mxu0 0.0
    %669 = vmatprep.mubr.f32.mxu0 0.0
    %670 = vmatmul.mubr.f32.gmra.mrb[0].mxu0 %v600
    %v671 = vpop.f32.mrb[0].mxu0
    %v672 = vadd.f32 0.0, %v671
    %v673 = vpop.f32.mrb[0].mxu0
    %674 = vdwg.mxu0
    %v676 = vsel %vm157, %v276, 0
    %v679 = vsel %vm157, %v284, 0
    %681 = vmatprep.subr.mxu0 0.0
    %682 = vmatpush1.xpose.msra.mxu0 %v679
    %683 = vmatprep.subr.mxu0 0.0
    %684 = vmatpush1.xpose.msra.mxu0 0.0
    %685 = vmatprep.subr.mxu0 0.0
    %686 = vmatpush1.xpose.msra.mxu0 0.0
    %687 = vmatprep.subr.mxu0 0.0
    %688 = vmatpush1.xpose.msra.mxu0 0.0
    %689 = vmatprep.subr.mxu0 0.0
    %690 = vmatpush1.xpose.msra.mxu0 0.0
    %691 = vmatprep.subr.mxu0 0.0
    %692 = vmatpush1.xpose.msra.mxu0 0.0
    %693 = vmatprep.subr.mxu0 0.0
    %694 = vmatpush1.xpose.msra.mxu0 0.0
    %695 = vmatprep.subr.mxu0 0.0
    %696 = vmatpush1.xpose.msra.mxu0 0.0
    %697 = vmatprep.subr.mxu0 0.0
    %698 = vmatpush1.xpose.msra.mxu0 0.0
    %699 = vmatprep.subr.mxu0 0.0
    %700 = vmatpush1.xpose.msra.mxu0 0.0
    %701 = vmatprep.subr.mxu0 0.0
    %702 = vmatpush1.xpose.msra.mxu0 0.0
    %703 = vmatprep.subr.mxu0 0.0
    %704 = vmatpush1.xpose.msra.mxu0 0.0
    %705 = vmatprep.subr.mxu0 0.0
    %706 = vmatpush1.xpose.msra.mxu0 0.0
    %707 = vmatprep.subr.mxu0 0.0
    %708 = vmatpush1.xpose.msra.mxu0 0.0
    %709 = vmatprep.subr.mxu0 0.0
    %710 = vmatpush1.xpose.msra.mxu0 0.0
    %711 = vmatprep.subr.mxu0 0.0
    %712 = vmatpush1.xpose.msra.mxu0 0.0
    %713 = vmatprep.subr.mxu0 0.0
    %714 = vmatpush1.xpose.msra.mxu0 0.0
    %715 = vmatprep.subr.mxu0 0.0
    %716 = vmatpush1.xpose.msra.mxu0 0.0
    %717 = vmatprep.subr.mxu0 0.0
    %718 = vmatpush1.xpose.msra.mxu0 0.0
    %719 = vmatprep.subr.mxu0 0.0
    %720 = vmatpush1.xpose.msra.mxu0 0.0
    %721 = vmatprep.subr.mxu0 0.0
    %722 = vmatpush1.xpose.msra.mxu0 0.0
    %723 = vmatprep.subr.mxu0 0.0
    %724 = vmatpush1.xpose.msra.mxu0 0.0
    %725 = vmatprep.subr.mxu0 0.0
    %726 = vmatpush1.xpose.msra.mxu0 0.0
    %727 = vmatprep.subr.mxu0 0.0
    %728 = vmatpush1.xpose.msra.mxu0 0.0
    %729 = vmatprep.subr.mxu0 0.0
    %730 = vmatpush1.xpose.msra.mxu0 0.0
    %731 = vmatprep.subr.mxu0 0.0
    %732 = vmatpush1.xpose.msra.mxu0 0.0
    %733 = vmatprep.subr.mxu0 0.0
    %734 = vmatpush1.xpose.msra.mxu0 0.0
    %735 = vmatprep.subr.mxu0 0.0
    %736 = vmatpush1.xpose.msra.mxu0 0.0
    %737 = vmatprep.subr.mxu0 0.0
    %738 = vmatpush1.xpose.msra.mxu0 0.0
    %739 = vmatprep.subr.mxu0 0.0
    %740 = vmatpush1.xpose.msra.mxu0 0.0
    %741 = vmatprep.subr.mxu0 0.0
    %742 = vmatpush1.xpose.msra.mxu0 0.0
    %743 = vmatprep.subr.mxu0 0.0
    %744 = vmatpush1.xpose.msra.mxu0 0.0
    %745 = vmatprep.mubr.f32.mxu0 0.0
    %746 = vmatmul.mubr.f32.gmra.mrb[0].mxu0 %v676
    %v747 = vpop.f32.mrb[0].mxu0
    %v748 = vadd.f32 0.0, %v747
    %v749 = vpop.f32.mrb[0].mxu0
    %750 = vdwg.mxu0
    %v752 = vsel %vm157, %v277, 0
    %v755 = vsel %vm157, %v285, 0
    %757 = vmatprep.subr.mxu0 0.0
    %758 = vmatpush1.xpose.msra.mxu0 %v755
    %759 = vmatprep.subr.mxu0 0.0
    %760 = vmatpush1.xpose.msra.mxu0 0.0
    %761 = vmatprep.subr.mxu0 0.0
    %762 = vmatpush1.xpose.msra.mxu0 0.0
    %763 = vmatprep.subr.mxu0 0.0
    %764 = vmatpush1.xpose.msra.mxu0 0.0
    %765 = vmatprep.subr.mxu0 0.0
    %766 = vmatpush1.xpose.msra.mxu0 0.0
    %767 = vmatprep.subr.mxu0 0.0
    %768 = vmatpush1.xpose.msra.mxu0 0.0
    %769 = vmatprep.subr.mxu0 0.0
    %770 = vmatpush1.xpose.msra.mxu0 0.0
    %771 = vmatprep.subr.mxu0 0.0
    %772 = vmatpush1.xpose.msra.mxu0 0.0
    %773 = vmatprep.subr.mxu0 0.0
    %774 = vmatpush1.xpose.msra.mxu0 0.0
    %775 = vmatprep.subr.mxu0 0.0
    %776 = vmatpush1.xpose.msra.mxu0 0.0
    %777 = vmatprep.subr.mxu0 0.0
    %778 = vmatpush1.xpose.msra.mxu0 0.0
    %779 = vmatprep.subr.mxu0 0.0
    %780 = vmatpush1.xpose.msra.mxu0 0.0
    %781 = vmatprep.subr.mxu0 0.0
    %782 = vmatpush1.xpose.msra.mxu0 0.0
    %783 = vmatprep.subr.mxu0 0.0
    %784 = vmatpush1.xpose.msra.mxu0 0.0
    %785 = vmatprep.subr.mxu0 0.0
    %786 = vmatpush1.xpose.msra.mxu0 0.0
    %787 = vmatprep.subr.mxu0 0.0
    %788 = vmatpush1.xpose.msra.mxu0 0.0
    %789 = vmatprep.subr.mxu0 0.0
    %790 = vmatpush1.xpose.msra.mxu0 0.0
    %791 = vmatprep.subr.mxu0 0.0
    %792 = vmatpush1.xpose.msra.mxu0 0.0
    %793 = vmatprep.subr.mxu0 0.0
    %794 = vmatpush1.xpose.msra.mxu0 0.0
    %795 = vmatprep.subr.mxu0 0.0
    %796 = vmatpush1.xpose.msra.mxu0 0.0
    %797 = vmatprep.subr.mxu0 0.0
    %798 = vmatpush1.xpose.msra.mxu0 0.0
    %799 = vmatprep.subr.mxu0 0.0
    %800 = vmatpush1.xpose.msra.mxu0 0.0
    %801 = vmatprep.subr.mxu0 0.0
    %802 = vmatpush1.xpose.msra.mxu0 0.0
    %803 = vmatprep.subr.mxu0 0.0
    %804 = vmatpush1.xpose.msra.mxu0 0.0
    %805 = vmatprep.subr.mxu0 0.0
    %806 = vmatpush1.xpose.msra.mxu0 0.0
    %807 = vmatprep.subr.mxu0 0.0
    %808 = vmatpush1.xpose.msra.mxu0 0.0
    %809 = vmatprep.subr.mxu0 0.0
    %810 = vmatpush1.xpose.msra.mxu0 0.0
    %811 = vmatprep.subr.mxu0 0.0
    %812 = vmatpush1.xpose.msra.mxu0 0.0
    %813 = vmatprep.subr.mxu0 0.0
    %814 = vmatpush1.xpose.msra.mxu0 0.0
    %815 = vmatprep.subr.mxu0 0.0
    %816 = vmatpush1.xpose.msra.mxu0 0.0
    %817 = vmatprep.subr.mxu0 0.0
    %818 = vmatpush1.xpose.msra.mxu0 0.0
    %819 = vmatprep.subr.mxu0 0.0
    %820 = vmatpush1.xpose.msra.mxu0 0.0
    %821 = vmatprep.mubr.f32.mxu0 0.0
    %822 = vmatmul.mubr.f32.gmra.mrb[0].mxu0 %v752
    %v823 = vpop.f32.mrb[0].mxu0
    %v824 = vadd.f32 0.0, %v823
    %v825 = vpop.f32.mrb[0].mxu0
    %826 = vdwg.mxu0
    %v828 = vsel %vm157, %v278, 0
    %v831 = vsel %vm157, %v286, 0
    %833 = vmatprep.subr.mxu0 0.0
    %834 = vmatpush1.xpose.msra.mxu0 %v831
    %835 = vmatprep.subr.mxu0 0.0
    %836 = vmatpush1.xpose.msra.mxu0 0.0
    %837 = vmatprep.subr.mxu0 0.0
    %838 = vmatpush1.xpose.msra.mxu0 0.0
    %839 = vmatprep.subr.mxu0 0.0
    %840 = vmatpush1.xpose.msra.mxu0 0.0
    %841 = vmatprep.subr.mxu0 0.0
    %842 = vmatpush1.xpose.msra.mxu0 0.0
    %843 = vmatprep.subr.mxu0 0.0
    %844 = vmatpush1.xpose.msra.mxu0 0.0
    %845 = vmatprep.subr.mxu0 0.0
    %846 = vmatpush1.xpose.msra.mxu0 0.0
    %847 = vmatprep.subr.mxu0 0.0
    %848 = vmatpush1.xpose.msra.mxu0 0.0
    %849 = vmatprep.subr.mxu0 0.0
    %850 = vmatpush1.xpose.msra.mxu0 0.0
    %851 = vmatprep.subr.mxu0 0.0
    %852 = vmatpush1.xpose.msra.mxu0 0.0
    %853 = vmatprep.subr.mxu0 0.0
    %854 = vmatpush1.xpose.msra.mxu0 0.0
    %855 = vmatprep.subr.mxu0 0.0
    %856 = vmatpush1.xpose.msra.mxu0 0.0
    %857 = vmatprep.subr.mxu0 0.0
    %858 = vmatpush1.xpose.msra.mxu0 0.0
    %859 = vmatprep.subr.mxu0 0.0
    %860 = vmatpush1.xpose.msra.mxu0 0.0
    %861 = vmatprep.subr.mxu0 0.0
    %862 = vmatpush1.xpose.msra.mxu0 0.0
    %863 = vmatprep.subr.mxu0 0.0
    %864 = vmatpush1.xpose.msra.mxu0 0.0
    %865 = vmatprep.subr.mxu0 0.0
    %866 = vmatpush1.xpose.msra.mxu0 0.0
    %867 = vmatprep.subr.mxu0 0.0
    %868 = vmatpush1.xpose.msra.mxu0 0.0
    %869 = vmatprep.subr.mxu0 0.0
    %870 = vmatpush1.xpose.msra.mxu0 0.0
    %871 = vmatprep.subr.mxu0 0.0
    %872 = vmatpush1.xpose.msra.mxu0 0.0
    %873 = vmatprep.subr.mxu0 0.0
    %874 = vmatpush1.xpose.msra.mxu0 0.0
    %875 = vmatprep.subr.mxu0 0.0
    %876 = vmatpush1.xpose.msra.mxu0 0.0
    %877 = vmatprep.subr.mxu0 0.0
    %878 = vmatpush1.xpose.msra.mxu0 0.0
    %879 = vmatprep.subr.mxu0 0.0
    %880 = vmatpush1.xpose.msra.mxu0 0.0
    %881 = vmatprep.subr.mxu0 0.0
    %882 = vmatpush1.xpose.msra.mxu0 0.0
    %883 = vmatprep.subr.mxu0 0.0
    %884 = vmatpush1.xpose.msra.mxu0 0.0
    %885 = vmatprep.subr.mxu0 0.0
    %886 = vmatpush1.xpose.msra.mxu0 0.0
    %887 = vmatprep.subr.mxu0 0.0
    %888 = vmatpush1.xpose.msra.mxu0 0.0
    %889 = vmatprep.subr.mxu0 0.0
    %890 = vmatpush1.xpose.msra.mxu0 0.0
    %891 = vmatprep.subr.mxu0 0.0
    %892 = vmatpush1.xpose.msra.mxu0 0.0
    %893 = vmatprep.subr.mxu0 0.0
    %894 = vmatpush1.xpose.msra.mxu0 0.0
    %895 = vmatprep.subr.mxu0 0.0
    %896 = vmatpush1.xpose.msra.mxu0 0.0
    %897 = vmatprep.mubr.f32.mxu0 0.0
    %898 = vmatmul.mubr.f32.gmra.mrb[0].mxu0 %v828
    %v899 = vpop.f32.mrb[0].mxu0
    %v900 = vadd.f32 0.0, %v899
    %v901 = vpop.f32.mrb[0].mxu0
    %902 = vdwg.mxu0
    %v903 = vmul.f32 %v368, 0.35355338
    %v904 = vmul.f32 %v444, 0.35355338
    %v905 = vmul.f32 %v520, 0.35355338
    %v906 = vmul.f32 %v596, 0.35355338
    %v907 = vmul.f32 %v672, 0.35355338
    %v908 = vmul.f32 %v748, 0.35355338
    %v909 = vmul.f32 %v824, 0.35355338
    %v910 = vmul.f32 %v900, 0.35355338
    %v911 = vsel %vm157, %v903, -inf
    %912 = vmax.xlane.f32.xlu0 %v911
    %v913 = vpop.xlane.xlu0 %912
    %v914 = vsel %vm157, %v904, -inf
    %915 = vmax.xlane.f32.xlu0 %v914
    %v916 = vpop.xlane.xlu0 %915
    %v917 = vsel %vm157, %v905, -inf
    %918 = vmax.xlane.f32.xlu0 %v917
    %v919 = vpop.xlane.xlu0 %918
    %v920 = vsel %vm157, %v906, -inf
    %921 = vmax.xlane.f32.xlu0 %v920
    %v922 = vpop.xlane.xlu0 %921
    %v923 = vsel %vm157, %v907, -inf
    %924 = vmax.xlane.f32.xlu0 %v923
    %v925 = vpop.xlane.xlu0 %924
    %v926 = vsel %vm157, %v908, -inf
    %927 = vmax.xlane.f32.xlu0 %v926
    %v928 = vpop.xlane.xlu0 %927
    %v929 = vsel %vm157, %v909, -inf
    %930 = vmax.xlane.f32.xlu0 %v929
    %v931 = vpop.xlane.xlu0 %930
    %v932 = vsel %vm157, %v910, -inf
    %933 = vmax.xlane.f32.xlu0 %v932
    %v934 = vpop.xlane.xlu0 %933
    %v935 = vsub.f32 %v903, %v913
    %v936 = vsub.f32 %v904, %v916
    %v937 = vsub.f32 %v905, %v919
    %v938 = vsub.f32 %v906, %v922
    %v939 = vsub.f32 %v907, %v925
    %v940 = vsub.f32 %v908, %v928
    %v941 = vsub.f32 %v909, %v931
    %v942 = vsub.f32 %v910, %v934
    %v943 = vmul.f32 %v935, 1.442695
    %v944 = vpow.pop %v943
    %v945 = vmul.f32 %v936, 1.442695
    %v946 = vpow.pop %v945
    %v947 = vmul.f32 %v937, 1.442695
    %v948 = vpow.pop %v947
    %v949 = vmul.f32 %v938, 1.442695
    %v950 = vpow.pop %v949
    %v951 = vmul.f32 %v939, 1.442695
    %v952 = vpow.pop %v951
    %v953 = vmul.f32 %v940, 1.442695
    %v954 = vpow.pop %v953
    %v955 = vmul.f32 %v941, 1.442695
    %v956 = vpow.pop %v955
    %v957 = vmul.f32 %v942, 1.442695
    %v958 = vpow.pop %v957
    %v959 = vsel %vm157, %v944, 0.0
    %960 = vadd.xlane.f32.xlu0 %v959
    %v961 = vpop.xlane.xlu0 %960
    %v962 = vsel %vm157, %v946, 0.0
    %963 = vadd.xlane.f32.xlu0 %v962
    %v964 = vpop.xlane.xlu0 %963
    %v965 = vsel %vm157, %v948, 0.0
    %966 = vadd.xlane.f32.xlu0 %v965
    %v967 = vpop.xlane.xlu0 %966
    %v968 = vsel %vm157, %v950, 0.0
    %969 = vadd.xlane.f32.xlu0 %v968
    %v970 = vpop.xlane.xlu0 %969
    %v971 = vsel %vm157, %v952, 0.0
    %972 = vadd.xlane.f32.xlu0 %v971
    %v973 = vpop.xlane.xlu0 %972
    %v974 = vsel %vm157, %v954, 0.0
    %975 = vadd.xlane.f32.xlu0 %v974
    %v976 = vpop.xlane.xlu0 %975
    %v977 = vsel %vm157, %v956, 0.0
    %978 = vadd.xlane.f32.xlu0 %v977
    %v979 = vpop.xlane.xlu0 %978
    %v980 = vsel %vm157, %v958, 0.0
    %981 = vadd.xlane.f32.xlu0 %v980
    %v982 = vpop.xlane.xlu0 %981
    %v983 = vrcp.pop %v961
    %v984 = vrcp.pop %v964
    %v985 = vrcp.pop %v967
    %v986 = vrcp.pop %v970
    %v987 = vrcp.pop %v973
    %v988 = vrcp.pop %v976
    %v989 = vrcp.pop %v979
    %v990 = vrcp.pop %v982
    %v991 = vmul.f32 %v944, %v983
    %v992 = vmul.f32 %v946, %v984
    %v993 = vmul.f32 %v948, %v985
    %v994 = vmul.f32 %v950, %v986
    %v995 = vmul.f32 %v952, %v987
    %v996 = vmul.f32 %v954, %v988
    %v997 = vmul.f32 %v956, %v989
    %v998 = vmul.f32 %v958, %v990
    %v1000 = vsel %vm157, %v991, 0
    %1002 = vmatprep.subr.mxu0 0.0
    %1003 = vmatpush1.msra.mxu0 %v287
    %1004 = vmatprep.subr.mxu0 0.0
    %1005 = vmatpush1.msra.mxu0 0.0
    %1006 = vmatprep.subr.mxu0 0.0
    %1007 = vmatpush1.msra.mxu0 0.0
    %1008 = vmatprep.subr.mxu0 0.0
    %1009 = vmatpush1.msra.mxu0 0.0
    %1010 = vmatprep.subr.mxu0 0.0
    %1011 = vmatpush1.msra.mxu0 0.0
    %1012 = vmatprep.subr.mxu0 0.0
    %1013 = vmatpush1.msra.mxu0 0.0
    %1014 = vmatprep.subr.mxu0 0.0
    %1015 = vmatpush1.msra.mxu0 0.0
    %1016 = vmatprep.subr.mxu0 0.0
    %1017 = vmatpush1.msra.mxu0 0.0
    %1018 = vmatprep.subr.mxu0 0.0
    %1019 = vmatpush1.msra.mxu0 0.0
    %1020 = vmatprep.subr.mxu0 0.0
    %1021 = vmatpush1.msra.mxu0 0.0
    %1022 = vmatprep.subr.mxu0 0.0
    %1023 = vmatpush1.msra.mxu0 0.0
    %1024 = vmatprep.subr.mxu0 0.0
    %1025 = vmatpush1.msra.mxu0 0.0
    %1026 = vmatprep.subr.mxu0 0.0
    %1027 = vmatpush1.msra.mxu0 0.0
    %1028 = vmatprep.subr.mxu0 0.0
    %1029 = vmatpush1.msra.mxu0 0.0
    %1030 = vmatprep.subr.mxu0 0.0
    %1031 = vmatpush1.msra.mxu0 0.0
    %1032 = vmatprep.subr.mxu0 0.0
    %1033 = vmatpush1.msra.mxu0 0.0
    %1034 = vmatprep.subr.mxu0 0.0
    %1035 = vmatpush1.msra.mxu0 0.0
    %1036 = vmatprep.subr.mxu0 0.0
    %1037 = vmatpush1.msra.mxu0 0.0
    %1038 = vmatprep.subr.mxu0 0.0
    %1039 = vmatpush1.msra.mxu0 0.0
    %1040 = vmatprep.subr.mxu0 0.0
    %1041 = vmatpush1.msra.mxu0 0.0
    %1042 = vmatprep.subr.mxu0 0.0
    %1043 = vmatpush1.msra.mxu0 0.0
    %1044 = vmatprep.subr.mxu0 0.0
    %1045 = vmatpush1.msra.mxu0 0.0
    %1046 = vmatprep.subr.mxu0 0.0
    %1047 = vmatpush1.msra.mxu0 0.0
    %1048 = vmatprep.subr.mxu0 0.0
    %1049 = vmatpush1.msra.mxu0 0.0
    %1050 = vmatprep.subr.mxu0 0.0
    %1051 = vmatpush1.msra.mxu0 0.0
    %1052 = vmatprep.subr.mxu0 0.0
    %1053 = vmatpush1.msra.mxu0 0.0
    %1054 = vmatprep.subr.mxu0 0.0
    %1055 = vmatpush1.msra.mxu0 0.0
    %1056 = vmatprep.subr.mxu0 0.0
    %1057 = vmatpush1.msra.mxu0 0.0
    %1058 = vmatprep.subr.mxu0 0.0
    %1059 = vmatpush1.msra.mxu0 0.0
    %1060 = vmatprep.subr.mxu0 0.0
    %1061 = vmatpush1.msra.mxu0 0.0
    %1062 = vmatprep.subr.mxu0 0.0
    %1063 = vmatpush1.msra.mxu0 0.0
    %1064 = vmatprep.subr.mxu0 0.0
    %1065 = vmatpush1.msra.mxu0 0.0
    %1066 = vmatprep.mubr.f32.mxu0 0.0
    %1067 = vmatmul.mubr.f32.gmra.mrb[0].mxu0 %v1000
    %v1068 = vpop.f32.mrb[0].mxu0
    %v1069 = vadd.f32 0.0, %v1068
    %v1070 = vpop.f32.mrb[0].mxu0
    %1071 = vdwg.mxu0
    %v1073 = vsel %vm157, %v992, 0
    %1075 = vmatprep.subr.mxu0 0.0
    %1076 = vmatpush1.msra.mxu0 %v288
    %1077 = vmatprep.subr.mxu0 0.0
    %1078 = vmatpush1.msra.mxu0 0.0
    %1079 = vmatprep.subr.mxu0 0.0
    %1080 = vmatpush1.msra.mxu0 0.0
    %1081 = vmatprep.subr.mxu0 0.0
    %1082 = vmatpush1.msra.mxu0 0.0
    %1083 = vmatprep.subr.mxu0 0.0
    %1084 = vmatpush1.msra.mxu0 0.0
    %1085 = vmatprep.subr.mxu0 0.0
    %1086 = vmatpush1.msra.mxu0 0.0
    %1087 = vmatprep.subr.mxu0 0.0
    %1088 = vmatpush1.msra.mxu0 0.0
    %1089 = vmatprep.subr.mxu0 0.0
    %1090 = vmatpush1.msra.mxu0 0.0
    %1091 = vmatprep.subr.mxu0 0.0
    %1092 = vmatpush1.msra.mxu0 0.0
    %1093 = vmatprep.subr.mxu0 0.0
    %1094 = vmatpush1.msra.mxu0 0.0
    %1095 = vmatprep.subr.mxu0 0.0
    %1096 = vmatpush1.msra.mxu0 0.0
    %1097 = vmatprep.subr.mxu0 0.0
    %1098 = vmatpush1.msra.mxu0 0.0
    %1099 = vmatprep.subr.mxu0 0.0
    %1100 = vmatpush1.msra.mxu0 0.0
    %1101 = vmatprep.subr.mxu0 0.0
    %1102 = vmatpush1.msra.mxu0 0.0
    %1103 = vmatprep.subr.mxu0 0.0
    %1104 = vmatpush1.msra.mxu0 0.0
    %1105 = vmatprep.subr.mxu0 0.0
    %1106 = vmatpush1.msra.mxu0 0.0
    %1107 = vmatprep.subr.mxu0 0.0
    %1108 = vmatpush1.msra.mxu0 0.0
    %1109 = vmatprep.subr.mxu0 0.0
    %1110 = vmatpush1.msra.mxu0 0.0
    %1111 = vmatprep.subr.mxu0 0.0
    %1112 = vmatpush1.msra.mxu0 0.0
    %1113 = vmatprep.subr.mxu0 0.0
    %1114 = vmatpush1.msra.mxu0 0.0
    %1115 = vmatprep.subr.mxu0 0.0
    %1116 = vmatpush1.msra.mxu0 0.0
    %1117 = vmatprep.subr.mxu0 0.0
    %1118 = vmatpush1.msra.mxu0 0.0
    %1119 = vmatprep.subr.mxu0 0.0
    %1120 = vmatpush1.msra.mxu0 0.0
    %1121 = vmatprep.subr.mxu0 0.0
    %1122 = vmatpush1.msra.mxu0 0.0
    %1123 = vmatprep.subr.mxu0 0.0
    %1124 = vmatpush1.msra.mxu0 0.0
    %1125 = vmatprep.subr.mxu0 0.0
    %1126 = vmatpush1.msra.mxu0 0.0
    %1127 = vmatprep.subr.mxu0 0.0
    %1128 = vmatpush1.msra.mxu0 0.0
    %1129 = vmatprep.subr.mxu0 0.0
    %1130 = vmatpush1.msra.mxu0 0.0
    %1131 = vmatprep.subr.mxu0 0.0
    %1132 = vmatpush1.msra.mxu0 0.0
    %1133 = vmatprep.subr.mxu0 0.0
    %1134 = vmatpush1.msra.mxu0 0.0
    %1135 = vmatprep.subr.mxu0 0.0
    %1136 = vmatpush1.msra.mxu0 0.0
    %1137 = vmatprep.subr.mxu0 0.0
    %1138 = vmatpush1.msra.mxu0 0.0
    %1139 = vmatprep.mubr.f32.mxu0 0.0
    %1140 = vmatmul.mubr.f32.gmra.mrb[0].mxu0 %v1073
    %v1141 = vpop.f32.mrb[0].mxu0
    %v1142 = vadd.f32 0.0, %v1141
    %v1143 = vpop.f32.mrb[0].mxu0
    %1144 = vdwg.mxu0
    %v1146 = vsel %vm157, %v993, 0
    %1148 = vmatprep.subr.mxu0 0.0
    %1149 = vmatpush1.msra.mxu0 %v289
    %1150 = vmatprep.subr.mxu0 0.0
    %1151 = vmatpush1.msra.mxu0 0.0
    %1152 = vmatprep.subr.mxu0 0.0
    %1153 = vmatpush1.msra.mxu0 0.0
    %1154 = vmatprep.subr.mxu0 0.0
    %1155 = vmatpush1.msra.mxu0 0.0
    %1156 = vmatprep.subr.mxu0 0.0
    %1157 = vmatpush1.msra.mxu0 0.0
    %1158 = vmatprep.subr.mxu0 0.0
    %1159 = vmatpush1.msra.mxu0 0.0
    %1160 = vmatprep.subr.mxu0 0.0
    %1161 = vmatpush1.msra.mxu0 0.0
    %1162 = vmatprep.subr.mxu0 0.0
    %1163 = vmatpush1.msra.mxu0 0.0
    %1164 = vmatprep.subr.mxu0 0.0
    %1165 = vmatpush1.msra.mxu0 0.0
    %1166 = vmatprep.subr.mxu0 0.0
    %1167 = vmatpush1.msra.mxu0 0.0
    %1168 = vmatprep.subr.mxu0 0.0
    %1169 = vmatpush1.msra.mxu0 0.0
    %1170 = vmatprep.subr.mxu0 0.0
    %1171 = vmatpush1.msra.mxu0 0.0
    %1172 = vmatprep.subr.mxu0 0.0
    %1173 = vmatpush1.msra.mxu0 0.0
    %1174 = vmatprep.subr.mxu0 0.0
    %1175 = vmatpush1.msra.mxu0 0.0
    %1176 = vmatprep.subr.mxu0 0.0
    %1177 = vmatpush1.msra.mxu0 0.0
    %1178 = vmatprep.subr.mxu0 0.0
    %1179 = vmatpush1.msra.mxu0 0.0
    %1180 = vmatprep.subr.mxu0 0.0
    %1181 = vmatpush1.msra.mxu0 0.0
    %1182 = vmatprep.subr.mxu0 0.0
    %1183 = vmatpush1.msra.mxu0 0.0
    %1184 = vmatprep.subr.mxu0 0.0
    %1185 = vmatpush1.msra.mxu0 0.0
    %1186 = vmatprep.subr.mxu0 0.0
    %1187 = vmatpush1.msra.mxu0 0.0
    %1188 = vmatprep.subr.mxu0 0.0
    %1189 = vmatpush1.msra.mxu0 0.0
    %1190 = vmatprep.subr.mxu0 0.0
    %1191 = vmatpush1.msra.mxu0 0.0
    %1192 = vmatprep.subr.mxu0 0.0
    %1193 = vmatpush1.msra.mxu0 0.0
    %1194 = vmatprep.subr.mxu0 0.0
    %1195 = vmatpush1.msra.mxu0 0.0
    %1196 = vmatprep.subr.mxu0 0.0
    %1197 = vmatpush1.msra.mxu0 0.0
    %1198 = vmatprep.subr.mxu0 0.0
    %1199 = vmatpush1.msra.mxu0 0.0
    %1200 = vmatprep.subr.mxu0 0.0
    %1201 = vmatpush1.msra.mxu0 0.0
    %1202 = vmatprep.subr.mxu0 0.0
    %1203 = vmatpush1.msra.mxu0 0.0
    %1204 = vmatprep.subr.mxu0 0.0
    %1205 = vmatpush1.msra.mxu0 0.0
    %1206 = vmatprep.subr.mxu0 0.0
    %1207 = vmatpush1.msra.mxu0 0.0
    %1208 = vmatprep.subr.mxu0 0.0
    %1209 = vmatpush1.msra.mxu0 0.0
    %1210 = vmatprep.subr.mxu0 0.0
    %1211 = vmatpush1.msra.mxu0 0.0
    %1212 = vmatprep.mubr.f32.mxu0 0.0
    %1213 = vmatmul.mubr.f32.gmra.mrb[0].mxu0 %v1146
    %v1214 = vpop.f32.mrb[0].mxu0
    %v1215 = vadd.f32 0.0, %v1214
    %v1216 = vpop.f32.mrb[0].mxu0
    %1217 = vdwg.mxu0
    %v1219 = vsel %vm157, %v994, 0
    %1221 = vmatprep.subr.mxu0 0.0
    %1222 = vmatpush1.msra.mxu0 %v290
    %1223 = vmatprep.subr.mxu0 0.0
    %1224 = vmatpush1.msra.mxu0 0.0
    %1225 = vmatprep.subr.mxu0 0.0
    %1226 = vmatpush1.msra.mxu0 0.0
    %1227 = vmatprep.subr.mxu0 0.0
    %1228 = vmatpush1.msra.mxu0 0.0
    %1229 = vmatprep.subr.mxu0 0.0
    %1230 = vmatpush1.msra.mxu0 0.0
    %1231 = vmatprep.subr.mxu0 0.0
    %1232 = vmatpush1.msra.mxu0 0.0
    %1233 = vmatprep.subr.mxu0 0.0
    %1234 = vmatpush1.msra.mxu0 0.0
    %1235 = vmatprep.subr.mxu0 0.0
    %1236 = vmatpush1.msra.mxu0 0.0
    %1237 = vmatprep.subr.mxu0 0.0
    %1238 = vmatpush1.msra.mxu0 0.0
    %1239 = vmatprep.subr.mxu0 0.0
    %1240 = vmatpush1.msra.mxu0 0.0
    %1241 = vmatprep.subr.mxu0 0.0
    %1242 = vmatpush1.msra.mxu0 0.0
    %1243 = vmatprep.subr.mxu0 0.0
    %1244 = vmatpush1.msra.mxu0 0.0
    %1245 = vmatprep.subr.mxu0 0.0
    %1246 = vmatpush1.msra.mxu0 0.0
    %1247 = vmatprep.subr.mxu0 0.0
    %1248 = vmatpush1.msra.mxu0 0.0
    %1249 = vmatprep.subr.mxu0 0.0
    %1250 = vmatpush1.msra.mxu0 0.0
    %1251 = vmatprep.subr.mxu0 0.0
    %1252 = vmatpush1.msra.mxu0 0.0
    %1253 = vmatprep.subr.mxu0 0.0
    %1254 = vmatpush1.msra.mxu0 0.0
    %1255 = vmatprep.subr.mxu0 0.0
    %1256 = vmatpush1.msra.mxu0 0.0
    %1257 = vmatprep.subr.mxu0 0.0
    %1258 = vmatpush1.msra.mxu0 0.0
    %1259 = vmatprep.subr.mxu0 0.0
    %1260 = vmatpush1.msra.mxu0 0.0
    %1261 = vmatprep.subr.mxu0 0.0
    %1262 = vmatpush1.msra.mxu0 0.0
    %1263 = vmatprep.subr.mxu0 0.0
    %1264 = vmatpush1.msra.mxu0 0.0
    %1265 = vmatprep.subr.mxu0 0.0
    %1266 = vmatpush1.msra.mxu0 0.0
    %1267 = vmatprep.subr.mxu0 0.0
    %1268 = vmatpush1.msra.mxu0 0.0
    %1269 = vmatprep.subr.mxu0 0.0
    %1270 = vmatpush1.msra.mxu0 0.0
    %1271 = vmatprep.subr.mxu0 0.0
    %1272 = vmatpush1.msra.mxu0 0.0
    %1273 = vmatprep.subr.mxu0 0.0
    %1274 = vmatpush1.msra.mxu0 0.0
    %1275 = vmatprep.subr.mxu0 0.0
    %1276 = vmatpush1.msra.mxu0 0.0
    %1277 = vmatprep.subr.mxu0 0.0
    %1278 = vmatpush1.msra.mxu0 0.0
    %1279 = vmatprep.subr.mxu0 0.0
    %1280 = vmatpush1.msra.mxu0 0.0
    %1281 = vmatprep.subr.mxu0 0.0
    %1282 = vmatpush1.msra.mxu0 0.0
    %1283 = vmatprep.subr.mxu0 0.0
    %1284 = vmatpush1.msra.mxu0 0.0
    %1285 = vmatprep.mubr.f32.mxu0 0.0
    %1286 = vmatmul.mubr.f32.gmra.mrb[0].mxu0 %v1219
    %v1287 = vpop.f32.mrb[0].mxu0
    %v1288 = vadd.f32 0.0, %v1287
    %v1289 = vpop.f32.mrb[0].mxu0
    %1290 = vdwg.mxu0
    %v1292 = vsel %vm157, %v995, 0
    %1294 = vmatprep.subr.mxu0 0.0
    %1295 = vmatpush1.msra.mxu0 %v291
    %1296 = vmatprep.subr.mxu0 0.0
    %1297 = vmatpush1.msra.mxu0 0.0
    %1298 = vmatprep.subr.mxu0 0.0
    %1299 = vmatpush1.msra.mxu0 0.0
    %1300 = vmatprep.subr.mxu0 0.0
    %1301 = vmatpush1.msra.mxu0 0.0
    %1302 = vmatprep.subr.mxu0 0.0
    %1303 = vmatpush1.msra.mxu0 0.0
    %1304 = vmatprep.subr.mxu0 0.0
    %1305 = vmatpush1.msra.mxu0 0.0
    %1306 = vmatprep.subr.mxu0 0.0
    %1307 = vmatpush1.msra.mxu0 0.0
    %1308 = vmatprep.subr.mxu0 0.0
    %1309 = vmatpush1.msra.mxu0 0.0
    %1310 = vmatprep.subr.mxu0 0.0
    %1311 = vmatpush1.msra.mxu0 0.0
    %1312 = vmatprep.subr.mxu0 0.0
    %1313 = vmatpush1.msra.mxu0 0.0
    %1314 = vmatprep.subr.mxu0 0.0
    %1315 = vmatpush1.msra.mxu0 0.0
    %1316 = vmatprep.subr.mxu0 0.0
    %1317 = vmatpush1.msra.mxu0 0.0
    %1318 = vmatprep.subr.mxu0 0.0
    %1319 = vmatpush1.msra.mxu0 0.0
    %1320 = vmatprep.subr.mxu0 0.0
    %1321 = vmatpush1.msra.mxu0 0.0
    %1322 = vmatprep.subr.mxu0 0.0
    %1323 = vmatpush1.msra.mxu0 0.0
    %1324 = vmatprep.subr.mxu0 0.0
    %1325 = vmatpush1.msra.mxu0 0.0
    %1326 = vmatprep.subr.mxu0 0.0
    %1327 = vmatpush1.msra.mxu0 0.0
    %1328 = vmatprep.subr.mxu0 0.0
    %1329 = vmatpush1.msra.mxu0 0.0
    %1330 = vmatprep.subr.mxu0 0.0
    %1331 = vmatpush1.msra.mxu0 0.0
    %1332 = vmatprep.subr.mxu0 0.0
    %1333 = vmatpush1.msra.mxu0 0.0
    %1334 = vmatprep.subr.mxu0 0.0
    %1335 = vmatpush1.msra.mxu0 0.0
    %1336 = vmatprep.subr.mxu0 0.0
    %1337 = vmatpush1.msra.mxu0 0.0
    %1338 = vmatprep.subr.mxu0 0.0
    %1339 = vmatpush1.msra.mxu0 0.0
    %1340 = vmatprep.subr.mxu0 0.0
    %1341 = vmatpush1.msra.mxu0 0.0
    %1342 = vmatprep.subr.mxu0 0.0
    %1343 = vmatpush1.msra.mxu0 0.0
    %1344 = vmatprep.subr.mxu0 0.0
    %1345 = vmatpush1.msra.mxu0 0.0
    %1346 = vmatprep.subr.mxu0 0.0
    %1347 = vmatpush1.msra.mxu0 0.0
    %1348 = vmatprep.subr.mxu0 0.0
    %1349 = vmatpush1.msra.mxu0 0.0
    %1350 = vmatprep.subr.mxu0 0.0
    %1351 = vmatpush1.msra.mxu0 0.0
    %1352 = vmatprep.subr.mxu0 0.0
    %1353 = vmatpush1.msra.mxu0 0.0
    %1354 = vmatprep.subr.mxu0 0.0
    %1355 = vmatpush1.msra.mxu0 0.0
    %1356 = vmatprep.subr.mxu0 0.0
    %1357 = vmatpush1.msra.mxu0 0.0
    %1358 = vmatprep.mubr.f32.mxu0 0.0
    %1359 = vmatmul.mubr.f32.gmra.mrb[0].mxu0 %v1292
    %v1360 = vpop.f32.mrb[0].mxu0
    %v1361 = vadd.f32 0.0, %v1360
    %v1362 = vpop.f32.mrb[0].mxu0
    %1363 = vdwg.mxu0
    %v1365 = vsel %vm157, %v996, 0
    %1367 = vmatprep.subr.mxu0 0.0
    %1368 = vmatpush1.msra.mxu0 %v292
    %1369 = vmatprep.subr.mxu0 0.0
    %1370 = vmatpush1.msra.mxu0 0.0
    %1371 = vmatprep.subr.mxu0 0.0
    %1372 = vmatpush1.msra.mxu0 0.0
    %1373 = vmatprep.subr.mxu0 0.0
    %1374 = vmatpush1.msra.mxu0 0.0
    %1375 = vmatprep.subr.mxu0 0.0
    %1376 = vmatpush1.msra.mxu0 0.0
    %1377 = vmatprep.subr.mxu0 0.0
    %1378 = vmatpush1.msra.mxu0 0.0
    %1379 = vmatprep.subr.mxu0 0.0
    %1380 = vmatpush1.msra.mxu0 0.0
    %1381 = vmatprep.subr.mxu0 0.0
    %1382 = vmatpush1.msra.mxu0 0.0
    %1383 = vmatprep.subr.mxu0 0.0
    %1384 = vmatpush1.msra.mxu0 0.0
    %1385 = vmatprep.subr.mxu0 0.0
    %1386 = vmatpush1.msra.mxu0 0.0
    %1387 = vmatprep.subr.mxu0 0.0
    %1388 = vmatpush1.msra.mxu0 0.0
    %1389 = vmatprep.subr.mxu0 0.0
    %1390 = vmatpush1.msra.mxu0 0.0
    %1391 = vmatprep.subr.mxu0 0.0
    %1392 = vmatpush1.msra.mxu0 0.0
    %1393 = vmatprep.subr.mxu0 0.0
    %1394 = vmatpush1.msra.mxu0 0.0
    %1395 = vmatprep.subr.mxu0 0.0
    %1396 = vmatpush1.msra.mxu0 0.0
    %1397 = vmatprep.subr.mxu0 0.0
    %1398 = vmatpush1.msra.mxu0 0.0
    %1399 = vmatprep.subr.mxu0 0.0
    %1400 = vmatpush1.msra.mxu0 0.0
    %1401 = vmatprep.subr.mxu0 0.0
    %1402 = vmatpush1.msra.mxu0 0.0
    %1403 = vmatprep.subr.mxu0 0.0
    %1404 = vmatpush1.msra.mxu0 0.0
    %1405 = vmatprep.subr.mxu0 0.0
    %1406 = vmatpush1.msra.mxu0 0.0
    %1407 = vmatprep.subr.mxu0 0.0
    %1408 = vmatpush1.msra.mxu0 0.0
    %1409 = vmatprep.subr.mxu0 0.0
    %1410 = vmatpush1.msra.mxu0 0.0
    %1411 = vmatprep.subr.mxu0 0.0
    %1412 = vmatpush1.msra.mxu0 0.0
    %1413 = vmatprep.subr.mxu0 0.0
    %1414 = vmatpush1.msra.mxu0 0.0
    %1415 = vmatprep.subr.mxu0 0.0
    %1416 = vmatpush1.msra.mxu0 0.0
    %1417 = vmatprep.subr.mxu0 0.0
    %1418 = vmatpush1.msra.mxu0 0.0
    %1419 = vmatprep.subr.mxu0 0.0
    %1420 = vmatpush1.msra.mxu0 0.0
    %1421 = vmatprep.subr.mxu0 0.0
    %1422 = vmatpush1.msra.mxu0 0.0
    %1423 = vmatprep.subr.mxu0 0.0
    %1424 = vmatpush1.msra.mxu0 0.0
    %1425 = vmatprep.subr.mxu0 0.0
    %1426 = vmatpush1.msra.mxu0 0.0
    %1427 = vmatprep.subr.mxu0 0.0
    %1428 = vmatpush1.msra.mxu0 0.0
    %1429 = vmatprep.subr.mxu0 0.0
    %1430 = vmatpush1.msra.mxu0 0.0
    %1431 = vmatprep.mubr.f32.mxu0 0.0
    %1432 = vmatmul.mubr.f32.gmra.mrb[0].mxu0 %v1365
    %v1433 = vpop.f32.mrb[0].mxu0
    %v1434 = vadd.f32 0.0, %v1433
    %v1435 = vpop.f32.mrb[0].mxu0
    %1436 = vdwg.mxu0
    %v1438 = vsel %vm157, %v997, 0
    %1440 = vmatprep.subr.mxu0 0.0
    %1441 = vmatpush1.msra.mxu0 %v293
    %1442 = vmatprep.subr.mxu0 0.0
    %1443 = vmatpush1.msra.mxu0 0.0
    %1444 = vmatprep.subr.mxu0 0.0
    %1445 = vmatpush1.msra.mxu0 0.0
    %1446 = vmatprep.subr.mxu0 0.0
    %1447 = vmatpush1.msra.mxu0 0.0
    %1448 = vmatprep.subr.mxu0 0.0
    %1449 = vmatpush1.msra.mxu0 0.0
    %1450 = vmatprep.subr.mxu0 0.0
    %1451 = vmatpush1.msra.mxu0 0.0
    %1452 = vmatprep.subr.mxu0 0.0
    %1453 = vmatpush1.msra.mxu0 0.0
    %1454 = vmatprep.subr.mxu0 0.0
    %1455 = vmatpush1.msra.mxu0 0.0
    %1456 = vmatprep.subr.mxu0 0.0
    %1457 = vmatpush1.msra.mxu0 0.0
    %1458 = vmatprep.subr.mxu0 0.0
    %1459 = vmatpush1.msra.mxu0 0.0
    %1460 = vmatprep.subr.mxu0 0.0
    %1461 = vmatpush1.msra.mxu0 0.0
    %1462 = vmatprep.subr.mxu0 0.0
    %1463 = vmatpush1.msra.mxu0 0.0
    %1464 = vmatprep.subr.mxu0 0.0
    %1465 = vmatpush1.msra.mxu0 0.0
    %1466 = vmatprep.subr.mxu0 0.0
    %1467 = vmatpush1.msra.mxu0 0.0
    %1468 = vmatprep.subr.mxu0 0.0
    %1469 = vmatpush1.msra.mxu0 0.0
    %1470 = vmatprep.subr.mxu0 0.0
    %1471 = vmatpush1.msra.mxu0 0.0
    %1472 = vmatprep.subr.mxu0 0.0
    %1473 = vmatpush1.msra.mxu0 0.0
    %1474 = vmatprep.subr.mxu0 0.0
    %1475 = vmatpush1.msra.mxu0 0.0
    %1476 = vmatprep.subr.mxu0 0.0
    %1477 = vmatpush1.msra.mxu0 0.0
    %1478 = vmatprep.subr.mxu0 0.0
    %1479 = vmatpush1.msra.mxu0 0.0
    %1480 = vmatprep.subr.mxu0 0.0
    %1481 = vmatpush1.msra.mxu0 0.0
    %1482 = vmatprep.subr.mxu0 0.0
    %1483 = vmatpush1.msra.mxu0 0.0
    %1484 = vmatprep.subr.mxu0 0.0
    %1485 = vmatpush1.msra.mxu0 0.0
    %1486 = vmatprep.subr.mxu0 0.0
    %1487 = vmatpush1.msra.mxu0 0.0
    %1488 = vmatprep.subr.mxu0 0.0
    %1489 = vmatpush1.msra.mxu0 0.0
    %1490 = vmatprep.subr.mxu0 0.0
    %1491 = vmatpush1.msra.mxu0 0.0
    %1492 = vmatprep.subr.mxu0 0.0
    %1493 = vmatpush1.msra.mxu0 0.0
    %1494 = vmatprep.subr.mxu0 0.0
    %1495 = vmatpush1.msra.mxu0 0.0
    %1496 = vmatprep.subr.mxu0 0.0
    %1497 = vmatpush1.msra.mxu0 0.0
    %1498 = vmatprep.subr.mxu0 0.0
    %1499 = vmatpush1.msra.mxu0 0.0
    %1500 = vmatprep.subr.mxu0 0.0
    %1501 = vmatpush1.msra.mxu0 0.0
    %1502 = vmatprep.subr.mxu0 0.0
    %1503 = vmatpush1.msra.mxu0 0.0
    %1504 = vmatprep.mubr.f32.mxu0 0.0
    %1505 = vmatmul.mubr.f32.gmra.mrb[0].mxu0 %v1438
    %v1506 = vpop.f32.mrb[0].mxu0
    %v1507 = vadd.f32 0.0, %v1506
    %v1508 = vpop.f32.mrb[0].mxu0
    %1509 = vdwg.mxu0
    %v1511 = vsel %vm157, %v998, 0
    %1513 = vmatprep.subr.mxu0 0.0
    %1514 = vmatpush1.msra.mxu0 %v294
    %1515 = vmatprep.subr.mxu0 0.0
    %1516 = vmatpush1.msra.mxu0 0.0
    %1517 = vmatprep.subr.mxu0 0.0
    %1518 = vmatpush1.msra.mxu0 0.0
    %1519 = vmatprep.subr.mxu0 0.0
    %1520 = vmatpush1.msra.mxu0 0.0
    %1521 = vmatprep.subr.mxu0 0.0
    %1522 = vmatpush1.msra.mxu0 0.0
    %1523 = vmatprep.subr.mxu0 0.0
    %1524 = vmatpush1.msra.mxu0 0.0
    %1525 = vmatprep.subr.mxu0 0.0
    %1526 = vmatpush1.msra.mxu0 0.0
    %1527 = vmatprep.subr.mxu0 0.0
    %1528 = vmatpush1.msra.mxu0 0.0
    %1529 = vmatprep.subr.mxu0 0.0
    %1530 = vmatpush1.msra.mxu0 0.0
    %1531 = vmatprep.subr.mxu0 0.0
    %1532 = vmatpush1.msra.mxu0 0.0
    %1533 = vmatprep.subr.mxu0 0.0
    %1534 = vmatpush1.msra.mxu0 0.0
    %1535 = vmatprep.subr.mxu0 0.0
    %1536 = vmatpush1.msra.mxu0 0.0
    %1537 = vmatprep.subr.mxu0 0.0
    %1538 = vmatpush1.msra.mxu0 0.0
    %1539 = vmatprep.subr.mxu0 0.0
    %1540 = vmatpush1.msra.mxu0 0.0
    %1541 = vmatprep.subr.mxu0 0.0
    %1542 = vmatpush1.msra.mxu0 0.0
    %1543 = vmatprep.subr.mxu0 0.0
    %1544 = vmatpush1.msra.mxu0 0.0
    %1545 = vmatprep.subr.mxu0 0.0
    %1546 = vmatpush1.msra.mxu0 0.0
    %1547 = vmatprep.subr.mxu0 0.0
    %1548 = vmatpush1.msra.mxu0 0.0
    %1549 = vmatprep.subr.mxu0 0.0
    %1550 = vmatpush1.msra.mxu0 0.0
    %1551 = vmatprep.subr.mxu0 0.0
    %1552 = vmatpush1.msra.mxu0 0.0
    %1553 = vmatprep.subr.mxu0 0.0
    %1554 = vmatpush1.msra.mxu0 0.0
    %1555 = vmatprep.subr.mxu0 0.0
    %1556 = vmatpush1.msra.mxu0 0.0
    %1557 = vmatprep.subr.mxu0 0.0
    %1558 = vmatpush1.msra.mxu0 0.0
    %1559 = vmatprep.subr.mxu0 0.0
    %1560 = vmatpush1.msra.mxu0 0.0
    %1561 = vmatprep.subr.mxu0 0.0
    %1562 = vmatpush1.msra.mxu0 0.0
    %1563 = vmatprep.subr.mxu0 0.0
    %1564 = vmatpush1.msra.mxu0 0.0
    %1565 = vmatprep.subr.mxu0 0.0
    %1566 = vmatpush1.msra.mxu0 0.0
    %1567 = vmatprep.subr.mxu0 0.0
    %1568 = vmatpush1.msra.mxu0 0.0
    %1569 = vmatprep.subr.mxu0 0.0
    %1570 = vmatpush1.msra.mxu0 0.0
    %1571 = vmatprep.subr.mxu0 0.0
    %1572 = vmatpush1.msra.mxu0 0.0
    %1573 = vmatprep.subr.mxu0 0.0
    %1574 = vmatpush1.msra.mxu0 0.0
    %1575 = vmatprep.subr.mxu0 0.0
    %1576 = vmatpush1.msra.mxu0 0.0
    %1577 = vmatprep.mubr.f32.mxu0 0.0
    %1578 = vmatmul.mubr.f32.gmra.mrb[0].mxu0 %v1511
    %v1579 = vpop.f32.mrb[0].mxu0
    %v1580 = vadd.f32 0.0, %v1579
    %v1581 = vpop.f32.mrb[0].mxu0
    %1582 = vdwg.mxu0
    %1583 = vst.msk [vmem:[#allocation5] sm:$0xff] %vm157, %v1069
    %1585 = vrot.lane.b32.xlu0 %v1142, 8
    %v1586 = vpop.permute.xlu0 %1585
    %vm1588 = vcmask 130112
    %1589 = vst.msk [vmem:[#allocation5] sm:$0xff] %vm1588, %v1586
    %1591 = vrot.lane.b32.xlu0 %v1215, 16
    %v1592 = vpop.permute.xlu0 %1591
    %vm1594 = vcmask 195712
    %1595 = vst.msk [vmem:[#allocation5] sm:$0xff] %vm1594, %v1592
    %1597 = vrot.lane.b32.xlu0 %v1288, 24
    %v1598 = vpop.permute.xlu0 %1597
    %vm1600 = vcmask 261312
    %1601 = vst.msk [vmem:[#allocation5] sm:$0xff] %vm1600, %v1598
    %1602 = vst.msk [vmem:[#allocation5 + $0x8] sm:$0xff] %vm157, %v1361
    %1604 = vrot.lane.b32.xlu0 %v1434, 8
    %v1605 = vpop.permute.xlu0 %1604
    %1607 = vst.msk [vmem:[#allocation5 + $0x8] sm:$0xff] %vm1588, %v1605
    %1609 = vrot.lane.b32.xlu0 %v1507, 16
    %v1610 = vpop.permute.xlu0 %1609
    %1612 = vst.msk [vmem:[#allocation5 + $0x8] sm:$0xff] %vm1594, %v1610
    %1614 = vrot.lane.b32.xlu0 %v1580, 24
    %v1615 = vpop.permute.xlu0 %1614
    %1617 = vst.msk [vmem:[#allocation5 + $0x8] sm:$0xff] %vm1600, %v1615
    %v1618 = vld [vmem:[#allocation5] sm:$0xff]
    %v1619 = vld [vmem:[#allocation5 + $0x8] sm:$0xff]
    %v1620 = vld [vmem:[#allocation11] sm:$0xff]
    %v1621 = vld [vmem:[#allocation11 + $0x8] sm:$0xff]
    %v1622 = vld [vmem:[#allocation11 + $0x10] sm:$0xff]
    %v1623 = vld [vmem:[#allocation11 + $0x18] sm:$0xff]
    %v1624 = vld [vmem:[%s4] sm:$0x1]
    %v1626 = vlaneseq
    %v1627 = vshrl.u32 %v1626, 7
    %v1628 = vsub.s32 0, %v1627
    %v1629 = vrot.slane %v1624, %v1628
    %v1632 = vsel %vm75, %v1618, 0
    %v1635 = vsel %vm75, %v1619, 0
    %1637 = vmatprep.subr.mxu0 0.0
    %1638 = vmatpush1.msra.mxu0 %v1620
    %1639 = vmatprep.subr.mxu0 0.0
    %1640 = vmatpush1.msra.mxu0 %v1621
    %1641 = vmatprep.subr.mxu0 0.0
    %1642 = vmatpush1.msra.mxu0 %v1622
    %1643 = vmatprep.subr.mxu0 0.0
    %1644 = vmatpush1.msra.mxu0 %v1623
    %1645 = vmatprep.subr.mxu0 0.0
    %1646 = vmatpush1.msra.mxu0 0.0
    %1647 = vmatprep.subr.mxu0 0.0
    %1648 = vmatpush1.msra.mxu0 0.0
    %1649 = vmatprep.subr.mxu0 0.0
    %1650 = vmatpush1.msra.mxu0 0.0
    %1651 = vmatprep.subr.mxu0 0.0
    %1652 = vmatpush1.msra.mxu0 0.0
    %1653 = vmatprep.subr.mxu0 0.0
    %1654 = vmatpush1.msra.mxu0 0.0
    %1655 = vmatprep.subr.mxu0 0.0
    %1656 = vmatpush1.msra.mxu0 0.0
    %1657 = vmatprep.subr.mxu0 0.0
    %1658 = vmatpush1.msra.mxu0 0.0
    %1659 = vmatprep.subr.mxu0 0.0
    %1660 = vmatpush1.msra.mxu0 0.0
    %1661 = vmatprep.subr.mxu0 0.0
    %1662 = vmatpush1.msra.mxu0 0.0
    %1663 = vmatprep.subr.mxu0 0.0
    %1664 = vmatpush1.msra.mxu0 0.0
    %1665 = vmatprep.subr.mxu0 0.0
    %1666 = vmatpush1.msra.mxu0 0.0
    %1667 = vmatprep.subr.mxu0 0.0
    %1668 = vmatpush1.msra.mxu0 0.0
    %1669 = vmatprep.subr.mxu0 0.0
    %1670 = vmatpush1.msra.mxu0 0.0
    %1671 = vmatprep.subr.mxu0 0.0
    %1672 = vmatpush1.msra.mxu0 0.0
    %1673 = vmatprep.subr.mxu0 0.0
    %1674 = vmatpush1.msra.mxu0 0.0
    %1675 = vmatprep.subr.mxu0 0.0
    %1676 = vmatpush1.msra.mxu0 0.0
    %1677 = vmatprep.subr.mxu0 0.0
    %1678 = vmatpush1.msra.mxu0 0.0
    %1679 = vmatprep.subr.mxu0 0.0
    %1680 = vmatpush1.msra.mxu0 0.0
    %1681 = vmatprep.subr.mxu0 0.0
    %1682 = vmatpush1.msra.mxu0 0.0
    %1683 = vmatprep.subr.mxu0 0.0
    %1684 = vmatpush1.msra.mxu0 0.0
    %1685 = vmatprep.subr.mxu0 0.0
    %1686 = vmatpush1.msra.mxu0 0.0
    %1687 = vmatprep.subr.mxu0 0.0
    %1688 = vmatpush1.msra.mxu0 0.0
    %1689 = vmatprep.subr.mxu0 0.0
    %1690 = vmatpush1.msra.mxu0 0.0
    %1691 = vmatprep.subr.mxu0 0.0
    %1692 = vmatpush1.msra.mxu0 0.0
    %1693 = vmatprep.subr.mxu0 0.0
    %1694 = vmatpush1.msra.mxu0 0.0
    %1695 = vmatprep.subr.mxu0 0.0
    %1696 = vmatpush1.msra.mxu0 0.0
    %1697 = vmatprep.subr.mxu0 0.0
    %1698 = vmatpush1.msra.mxu0 0.0
    %1699 = vmatprep.subr.mxu0 0.0
    %1700 = vmatpush1.msra.mxu0 0.0
    %1701 = vmatprep.mubr.f32.mxu0 0.0
    %1702 = vmatmul.mubr.f32.gmra.mrb[0].mxu0 %v1632
    %v1703 = vpop.f32.mrb[0].mxu0
    %v1704 = vadd.f32 %v1629, %v1703
    %v1705 = vpop.f32.mrb[0].mxu0
    %1706 = vmatprep.mubr.f32.mxu0 0.0
    %1707 = vmatmul.mubr.f32.gmra.mrb[0].mxu0 %v1635
    %v1708 = vpop.f32.mrb[0].mxu0
    %v1709 = vadd.f32 %v1629, %v1708
    %v1710 = vpop.f32.mrb[0].mxu0
    %1711 = vdwg.mxu0
    %1712 = vst.msk [vmem:[#allocation12] sm:$0xff] %vm75, %v1704
    %1713 = vst.msk [vmem:[#allocation12 + $0x8] sm:$0xff] %vm75, %v1709
    // Predicated region
    $region34: #{tpu_custom_call.1} parent=1 // pred_check
      _
    $region35: #{tpu_custom_call.1} parent=1 // pred_check_branch
      %1715 = sbr.rel (0) target = $region37
    $region36: #{tpu_custom_call.1} parent=1 // pred_region
      %s1717 = ssub.s32 256, 256
      %1718 = vsyncadd [#allocation8], %s1717
      %s1719 = sshll.u32 [#allocation12], 4
      %s1720 = int_to_ptr.vmem [resolvable:$true] %s1719
      %1725 = dma.vmem_to_hbm [thread:$0]  %s1720, 256, %s5, [#allocation8], 128, 128, 8
    $region37: #{tpu_custom_call.1} parent=1 // pred_fallthru
      _
    // Predicated region
    $region38: #{tpu_custom_call.1} parent=1 // pred_check
      _
    $region39: #{tpu_custom_call.1} parent=1 // pred_check_branch
      %1727 = sbr.rel (0) target = $region41
    $region40: #{tpu_custom_call.1} parent=1 // pred_region
      %1728 = dma.done [#allocation8], 256
    $region41: #{tpu_custom_call.1} parent=1 // pred_fallthru
      _
    %1729 = vsyncpa [#allocation7], 1
    %1730 = vsyncpa [#allocation10], 1
    %1731 = vsyncpa [#allocation8], 1

</llo_original>
